<compile_context>
chip_gen: v6e
topology: v6e:2x2x1
jax: 0.10.0
libtpu: 0.0.40
codegen_flags: <defaults>
</compile_context>

<pallas_src>
import jax
import jax.numpy as jnp
from jax.experimental import pallas as pl
from jax.experimental.pallas import tpu as pltpu

D_IN = 28 * 28        # 784
D_IN_PAD = 896        # 7 * 128 -> lane-dense
D_LAT = 32
D_LAT_PAD = 128       # lane-dense encoded width
LAYER_DIMS = [(D_IN, 128), (128, 64), (64, 32), (32, 64), (64, 128), (128, D_IN)]


def _autoencoder_kernel(
    x_ref,
    w1_ref, b1_ref, w2_ref, b2_ref, w3_ref, b3_ref,   # encoder params
    w4_ref, b4_ref, w5_ref, b5_ref, w6_ref, b6_ref,   # decoder params
    enc_ref, dec_ref,                                 # outputs
):
    cdt = w1_ref.dtype  # bf16 compute dtype for MXU operands
    x = x_ref[...].astype(cdt)

    # ---- encoder: Linear+ReLU, Linear+ReLU, Linear ----
    h = jnp.dot(x, w1_ref[...], preferred_element_type=jnp.float32) + b1_ref[...]
    h = jnp.maximum(h, 0.0).astype(cdt)
    h = jnp.dot(h, w2_ref[...], preferred_element_type=jnp.float32) + b2_ref[...]
    h = jnp.maximum(h, 0.0).astype(cdt)
    encoded = jnp.dot(h, w3_ref[...], preferred_element_type=jnp.float32) + b3_ref[...]

    # ---- decoder: Linear+ReLU, Linear+ReLU, Linear+Sigmoid ----
    d = encoded.astype(cdt)
    d = jnp.dot(d, w4_ref[...], preferred_element_type=jnp.float32) + b4_ref[...]
    d = jnp.maximum(d, 0.0).astype(cdt)
    d = jnp.dot(d, w5_ref[...], preferred_element_type=jnp.float32) + b5_ref[...]
    d = jnp.maximum(d, 0.0).astype(cdt)
    logits = jnp.dot(d, w6_ref[...], preferred_element_type=jnp.float32) + b6_ref[...]
    # sigmoid(x) = 0.5 * tanh(0.5 * x) + 0.5: one EUP push per element
    # (the scale/shift runs on the VALU, which has slack here).
    decoded = 0.5 * jnp.tanh(0.5 * logits) + 0.5

    enc_ref[...] = encoded.astype(enc_ref.dtype)   # f32, lane-padded to 128
    dec_ref[...] = decoded.astype(dec_ref.dtype)   # bf16, lane-padded to 896


def _round_up(n, m):
    return (n + m - 1) // m * m


def _choose_batch_tile(B, block_b, target_steps):
    """Pick a sublane-aligned batch tile giving >=2 (ideally ~target_steps)
    grid steps with minimal batch padding."""
    Bp8 = _round_up(max(B, 1), 8)
    TB = _round_up(pl.cdiv(Bp8, target_steps), 8)
    if Bp8 > 8:
        # Guarantee at least 2 grid steps (pipelining + v7x 2-TC sharding).
        TB = min(TB, _round_up(pl.cdiv(Bp8, 2), 8))
    TB = max(8, min(TB, block_b))
    Bp = _round_up(B, TB)
    return TB, Bp


def _prepare_params(params, compute_dtype):
    """Pad to lane-dense widths (784->896 on W1 rows / W6 cols+b6, 32->128 on
    W3 cols+b3 / W4 rows), cast weights to bf16, keep biases f32 (1, out)."""
    (w1, b1), (w2, b2), (w3, b3), (w4, b4), (w5, b5), (w6, b6) = params
    w1 = jnp.pad(w1, ((0, D_IN_PAD - D_IN), (0, 0)))
    w3 = jnp.pad(w3, ((0, 0), (0, D_LAT_PAD - D_LAT)))
    b3 = jnp.pad(b3, ((0, D_LAT_PAD - D_LAT),))
    w4 = jnp.pad(w4, ((0, D_LAT_PAD - D_LAT), (0, 0)))
    w6 = jnp.pad(w6, ((0, 0), (0, D_IN_PAD - D_IN)))
    b6 = jnp.pad(b6, ((0, D_IN_PAD - D_IN),))
    flat = []
    for w, b in zip([w1, w2, w3, w4, w5, w6], [b1, b2, b3, b4, b5, b6]):
        flat.append(w.astype(compute_dtype))
        flat.append(b.reshape(1, -1).astype(jnp.float32))
    return flat


def autoencoder_forward(x, params, *, block_b=512, target_steps=8):
    """x: (B, 784). params: 6 pairs (W, b) with W shaped (in, out).
    Returns (encoded (B,32) f32, decoded (B,784) bf16)."""
    B, d_in = x.shape
    assert d_in == D_IN, f"expected feature dim {D_IN}, got {d_in}"

    compute_dtype = jnp.bfloat16
    TB, Bp = _choose_batch_tile(B, block_b, target_steps)

    # bf16 input + lane/batch padding in one pad op.
    x = jnp.pad(x.astype(compute_dtype), ((0, Bp - B), (0, D_IN_PAD - D_IN)))
    flat_params = _prepare_params(params, compute_dtype)

    # x / outputs tiled over the batch grid axis; weights & biases use a
    # constant index_map -> DMA'd once, VMEM-resident across all grid steps
    # (~0.5 MiB of bf16 weights, negligible even double-buffered).
    in_specs = [pl.BlockSpec((TB, D_IN_PAD), lambda i: (i, 0))]
    in_specs += [pl.BlockSpec(p.shape, lambda i: (0, 0)) for p in flat_params]

    out_shapes = (
        jax.ShapeDtypeStruct((Bp, D_LAT_PAD), jnp.float32),
        jax.ShapeDtypeStruct((Bp, D_IN_PAD), jnp.bfloat16),
    )
    out_specs = (
        pl.BlockSpec((TB, D_LAT_PAD), lambda i: (i, 0)),
        pl.BlockSpec((TB, D_IN_PAD), lambda i: (i, 0)),
    )

    encoded, decoded = pl.pallas_call(
        _autoencoder_kernel,
        out_shape=out_shapes,
        grid=(Bp // TB,),
        in_specs=in_specs,
        out_specs=out_specs,
        compiler_params=pltpu.CompilerParams(
            # Batch tiles are independent -> shard across TensorCores on v7x;
            # harmless on single-TC v5e/v6e.
            dimension_semantics=("parallel",),
            # Fits v7x's 64 MiB VMEM with headroom; plenty on v5e/v6e.
            vmem_limit_bytes=48 * 1024 * 1024,
        ),
    )(x, *flat_params)

    return encoded[:B, :D_LAT], decoded[:B, :D_IN]


def init_params(key):
    """Deterministic init mirroring nn.Linear defaults; W stored (in, out), f32."""
    params = []
    for i, (din, dout) in enumerate(LAYER_DIMS):
        kw, kb, key = jax.random.split(jax.random.fold_in(key, i), 3)
        bound = 1.0 / jnp.sqrt(din)
        w = jax.random.uniform(kw, (din, dout), jnp.float32, -bound, bound)
        b = jax.random.uniform(kb, (dout,), jnp.float32, -bound, bound)
        params.append((w, b))
    return params


def reference_forward(x, params):
    """Pure-JAX f32 reference of the PyTorch forward."""
    h = x
    for i, (w, b) in enumerate(params[:3]):
        h = h @ w + b
        if i < 2:
            h = jnp.maximum(h, 0.0)
    encoded = h
    d = encoded
    for i, (w, b) in enumerate(params[3:]):
        d = d @ w + b
        if i < 2:
            d = jnp.maximum(d, 0.0)
    decoded = jax.nn.sigmoid(d)
    return encoded, decoded


if __name__ == "__main__":
    key = jax.random.PRNGKey(0)
    kx, kp = jax.random.split(key)
    params = init_params(kp)

    # --- small batch: tile chooser gives TB=8 -> 2 grid steps ---
    B = 16
    x = jax.random.uniform(kx, (B, D_IN), jnp.float32)
    encoded, decoded = autoencoder_forward(x, params)
    jax.block_until_ready((encoded, decoded))

    enc_ref, dec_ref = reference_forward(x, params)
    assert encoded.shape == (B, D_LAT) and decoded.shape == (B, D_IN)
    assert decoded.dtype == jnp.bfloat16
    # bf16 matmul operands + bf16 decoded output -> loosened tolerances vs f32 ref.
    assert jnp.allclose(encoded, enc_ref, atol=3e-2, rtol=3e-2)
    assert jnp.allclose(decoded.astype(jnp.float32), dec_ref, atol=2e-2, rtol=2e-2)

    # --- ragged batch, multi-step grid (exercises tiling + pad/slice path) ---
    B2 = 20
    x2 = jax.random.uniform(jax.random.fold_in(kx, 1), (B2, D_IN), jnp.float32)
    enc2, dec2 = autoencoder_forward(x2, params, block_b=8)
    jax.block_until_ready((enc2, dec2))
    enc2_ref, dec2_ref = reference_forward(x2, params)
    assert enc2.shape == (B2, D_LAT) and dec2.shape == (B2, D_IN)
    assert jnp.allclose(enc2, enc2_ref, atol=3e-2, rtol=3e-2)
    assert jnp.allclose(dec2.astype(jnp.float32), dec2_ref, atol=2e-2, rtol=2e-2)

    print("KERNEL_OK")
</pallas_src>

<mosaic_0001>
module attributes {stable_mosaic.version = 11 : i64} {
  func.func @_autoencoder_kernel(%arg0: i32, %arg1: memref<8x896xbf16, #tpu.memory_space<vmem>>, %arg2: memref<896x128xbf16, #tpu.memory_space<vmem>>, %arg3: memref<1x128xf32, #tpu.memory_space<vmem>>, %arg4: memref<128x64xbf16, #tpu.memory_space<vmem>>, %arg5: memref<1x64xf32, #tpu.memory_space<vmem>>, %arg6: memref<64x128xbf16, #tpu.memory_space<vmem>>, %arg7: memref<1x128xf32, #tpu.memory_space<vmem>>, %arg8: memref<128x64xbf16, #tpu.memory_space<vmem>>, %arg9: memref<1x64xf32, #tpu.memory_space<vmem>>, %arg10: memref<64x128xbf16, #tpu.memory_space<vmem>>, %arg11: memref<1x128xf32, #tpu.memory_space<vmem>>, %arg12: memref<128x896xbf16, #tpu.memory_space<vmem>>, %arg13: memref<1x896xf32, #tpu.memory_space<vmem>>, %arg14: memref<8x128xf32, #tpu.memory_space<vmem>>, %arg15: memref<8x896xbf16, #tpu.memory_space<vmem>>) attributes {dimension_semantics = [#tpu.dimension_semantics<parallel>], iteration_bounds = array<i64: 2>, scalar_prefetch = 0 : i64, scratch_operands = 0 : i64, tpu.core_type = #tpu.core_type<tc>, window_params = [{transform_indices = @transform_0, window_bounds = array<i64: 8, 896>}, {pipeline_mode = #tpu.pipeline_mode<synchronous>, transform_indices = @transform_1, window_bounds = array<i64: 896, 128>}, {pipeline_mode = #tpu.pipeline_mode<synchronous>, transform_indices = @transform_2, window_bounds = array<i64: 1, 128>}, {pipeline_mode = #tpu.pipeline_mode<synchronous>, transform_indices = @transform_3, window_bounds = array<i64: 128, 64>}, {pipeline_mode = #tpu.pipeline_mode<synchronous>, transform_indices = @transform_4, window_bounds = array<i64: 1, 64>}, {pipeline_mode = #tpu.pipeline_mode<synchronous>, transform_indices = @transform_5, window_bounds = array<i64: 64, 128>}, {pipeline_mode = #tpu.pipeline_mode<synchronous>, transform_indices = @transform_6, window_bounds = array<i64: 1, 128>}, {pipeline_mode = #tpu.pipeline_mode<synchronous>, transform_indices = @transform_7, window_bounds = array<i64: 128, 64>}, {pipeline_mode = #tpu.pipeline_mode<synchronous>, transform_indices = @transform_8, window_bounds = array<i64: 1, 64>}, {pipeline_mode = #tpu.pipeline_mode<synchronous>, transform_indices = @transform_9, window_bounds = array<i64: 64, 128>}, {pipeline_mode = #tpu.pipeline_mode<synchronous>, transform_indices = @transform_10, window_bounds = array<i64: 1, 128>}, {pipeline_mode = #tpu.pipeline_mode<synchronous>, transform_indices = @transform_11, window_bounds = array<i64: 128, 896>}, {pipeline_mode = #tpu.pipeline_mode<synchronous>, transform_indices = @transform_12, window_bounds = array<i64: 1, 896>}, {transform_indices = @transform_13, window_bounds = array<i64: 8, 128>}, {transform_indices = @transform_14, window_bounds = array<i64: 8, 896>}]} {
    %c0 = arith.constant 0 : index
    %c0_0 = arith.constant 0 : index
    %0 = vector.load %arg1[%c0, %c0_0] : memref<8x896xbf16, #tpu.memory_space<vmem>>, vector<8x896xbf16>
    %c0_1 = arith.constant 0 : index
    %c0_2 = arith.constant 0 : index
    %1 = vector.load %arg2[%c0_1, %c0_2] : memref<896x128xbf16, #tpu.memory_space<vmem>>, vector<896x128xbf16>
    %cst = arith.constant dense<0.000000e+00> : vector<8x128xf32>
    %2 = tpu.matmul %0, %1, %cst {dimension_numbers = #tpu.dot_dimension_numbers<[1], [0], [0], [1], [0, 0, 1, 1], [], []>} : vector<8x896xbf16>, vector<896x128xbf16>, vector<8x128xf32> -> vector<8x128xf32>
    %c0_3 = arith.constant 0 : index
    %c0_4 = arith.constant 0 : index
    %3 = vector.load %arg3[%c0_3, %c0_4] : memref<1x128xf32, #tpu.memory_space<vmem>>, vector<1x128xf32>
    %4 = vector.broadcast %3 : vector<1x128xf32> to vector<8x128xf32>
    %5 = arith.addf %2, %4 : vector<8x128xf32>
    %cst_5 = arith.constant 0.000000e+00 : f32
    %6 = vector.broadcast %cst_5 : f32 to vector<8x128xf32>
    %7 = arith.maximumf %5, %6 : vector<8x128xf32>
    %8 = arith.truncf %7 : vector<8x128xf32> to vector<8x128xbf16>
    %c0_6 = arith.constant 0 : index
    %c0_7 = arith.constant 0 : index
    %9 = vector.load %arg4[%c0_6, %c0_7] : memref<128x64xbf16, #tpu.memory_space<vmem>>, vector<128x64xbf16>
    %cst_8 = arith.constant dense<0.000000e+00> : vector<8x64xf32>
    %10 = tpu.matmul %8, %9, %cst_8 {dimension_numbers = #tpu.dot_dimension_numbers<[1], [0], [0], [1], [0, 0, 1, 1], [], []>} : vector<8x128xbf16>, vector<128x64xbf16>, vector<8x64xf32> -> vector<8x64xf32>
    %c0_9 = arith.constant 0 : index
    %c0_10 = arith.constant 0 : index
    %11 = vector.load %arg5[%c0_9, %c0_10] : memref<1x64xf32, #tpu.memory_space<vmem>>, vector<1x64xf32>
    %12 = vector.broadcast %11 : vector<1x64xf32> to vector<8x64xf32>
    %13 = arith.addf %10, %12 : vector<8x64xf32>
    %cst_11 = arith.constant 0.000000e+00 : f32
    %14 = vector.broadcast %cst_11 : f32 to vector<8x64xf32>
    %15 = arith.maximumf %13, %14 : vector<8x64xf32>
    %16 = arith.truncf %15 : vector<8x64xf32> to vector<8x64xbf16>
    %c0_12 = arith.constant 0 : index
    %c0_13 = arith.constant 0 : index
    %17 = vector.load %arg6[%c0_12, %c0_13] : memref<64x128xbf16, #tpu.memory_space<vmem>>, vector<64x128xbf16>
    %cst_14 = arith.constant dense<0.000000e+00> : vector<8x128xf32>
    %18 = tpu.matmul %16, %17, %cst_14 {dimension_numbers = #tpu.dot_dimension_numbers<[1], [0], [0], [1], [0, 0, 1, 1], [], []>} : vector<8x64xbf16>, vector<64x128xbf16>, vector<8x128xf32> -> vector<8x128xf32>
    %c0_15 = arith.constant 0 : index
    %c0_16 = arith.constant 0 : index
    %19 = vector.load %arg7[%c0_15, %c0_16] : memref<1x128xf32, #tpu.memory_space<vmem>>, vector<1x128xf32>
    %20 = vector.broadcast %19 : vector<1x128xf32> to vector<8x128xf32>
    %21 = arith.addf %18, %20 : vector<8x128xf32>
    %22 = arith.truncf %21 : vector<8x128xf32> to vector<8x128xbf16>
    %c0_17 = arith.constant 0 : index
    %c0_18 = arith.constant 0 : index
    %23 = vector.load %arg8[%c0_17, %c0_18] : memref<128x64xbf16, #tpu.memory_space<vmem>>, vector<128x64xbf16>
    %cst_19 = arith.constant dense<0.000000e+00> : vector<8x64xf32>
    %24 = tpu.matmul %22, %23, %cst_19 {dimension_numbers = #tpu.dot_dimension_numbers<[1], [0], [0], [1], [0, 0, 1, 1], [], []>} : vector<8x128xbf16>, vector<128x64xbf16>, vector<8x64xf32> -> vector<8x64xf32>
    %c0_20 = arith.constant 0 : index
    %c0_21 = arith.constant 0 : index
    %25 = vector.load %arg9[%c0_20, %c0_21] : memref<1x64xf32, #tpu.memory_space<vmem>>, vector<1x64xf32>
    %26 = vector.broadcast %25 : vector<1x64xf32> to vector<8x64xf32>
    %27 = arith.addf %24, %26 : vector<8x64xf32>
    %cst_22 = arith.constant 0.000000e+00 : f32
    %28 = vector.broadcast %cst_22 : f32 to vector<8x64xf32>
    %29 = arith.maximumf %27, %28 : vector<8x64xf32>
    %30 = arith.truncf %29 : vector<8x64xf32> to vector<8x64xbf16>
    %c0_23 = arith.constant 0 : index
    %c0_24 = arith.constant 0 : index
    %31 = vector.load %arg10[%c0_23, %c0_24] : memref<64x128xbf16, #tpu.memory_space<vmem>>, vector<64x128xbf16>
    %cst_25 = arith.constant dense<0.000000e+00> : vector<8x128xf32>
    %32 = tpu.matmul %30, %31, %cst_25 {dimension_numbers = #tpu.dot_dimension_numbers<[1], [0], [0], [1], [0, 0, 1, 1], [], []>} : vector<8x64xbf16>, vector<64x128xbf16>, vector<8x128xf32> -> vector<8x128xf32>
    %c0_26 = arith.constant 0 : index
    %c0_27 = arith.constant 0 : index
    %33 = vector.load %arg11[%c0_26, %c0_27] : memref<1x128xf32, #tpu.memory_space<vmem>>, vector<1x128xf32>
    %34 = vector.broadcast %33 : vector<1x128xf32> to vector<8x128xf32>
    %35 = arith.addf %32, %34 : vector<8x128xf32>
    %cst_28 = arith.constant 0.000000e+00 : f32
    %36 = vector.broadcast %cst_28 : f32 to vector<8x128xf32>
    %37 = arith.maximumf %35, %36 : vector<8x128xf32>
    %38 = arith.truncf %37 : vector<8x128xf32> to vector<8x128xbf16>
    %c0_29 = arith.constant 0 : index
    %c0_30 = arith.constant 0 : index
    %39 = vector.load %arg12[%c0_29, %c0_30] : memref<128x896xbf16, #tpu.memory_space<vmem>>, vector<128x896xbf16>
    %cst_31 = arith.constant dense<0.000000e+00> : vector<8x896xf32>
    %40 = tpu.matmul %38, %39, %cst_31 {dimension_numbers = #tpu.dot_dimension_numbers<[1], [0], [0], [1], [0, 0, 1, 1], [], []>} : vector<8x128xbf16>, vector<128x896xbf16>, vector<8x896xf32> -> vector<8x896xf32>
    %c0_32 = arith.constant 0 : index
    %c0_33 = arith.constant 0 : index
    %41 = vector.load %arg13[%c0_32, %c0_33] : memref<1x896xf32, #tpu.memory_space<vmem>>, vector<1x896xf32>
    %42 = vector.broadcast %41 : vector<1x896xf32> to vector<8x896xf32>
    %43 = arith.addf %40, %42 : vector<8x896xf32>
    %cst_34 = arith.constant 5.000000e-01 : f32
    %44 = vector.broadcast %cst_34 : f32 to vector<8x896xf32>
    %45 = arith.mulf %44, %43 : vector<8x896xf32>
    %46 = math.tanh %45 : vector<8x896xf32>
    %cst_35 = arith.constant 5.000000e-01 : f32
    %47 = vector.broadcast %cst_35 : f32 to vector<8x896xf32>
    %48 = arith.mulf %47, %46 : vector<8x896xf32>
    %cst_36 = arith.constant 5.000000e-01 : f32
    %49 = vector.broadcast %cst_36 : f32 to vector<8x896xf32>
    %50 = arith.addf %48, %49 : vector<8x896xf32>
    %c0_37 = arith.constant 0 : index
    %c0_38 = arith.constant 0 : index
    %51 = vector.load %arg14[%c0_37, %c0_38] : memref<8x128xf32, #tpu.memory_space<vmem>>, vector<8x128xf32>
    tpu.vector_store %arg14[%c0_37, %c0_38], %21 {strides = array<i32>} : memref<8x128xf32, #tpu.memory_space<vmem>>, vector<8x128xf32>,
    %52 = arith.truncf %50 : vector<8x896xf32> to vector<8x896xbf16>
    %c0_39 = arith.constant 0 : index
    %c0_40 = arith.constant 0 : index
    %53 = vector.load %arg15[%c0_39, %c0_40] : memref<8x896xbf16, #tpu.memory_space<vmem>>, vector<8x896xbf16>
    tpu.vector_store %arg15[%c0_39, %c0_40], %52 {strides = array<i32>} : memref<8x896xbf16, #tpu.memory_space<vmem>>, vector<8x896xbf16>,
    return
  }
  func.func @transform_0(%arg0: i32) -> (i32, i32) {
    %c0_i32 = arith.constant 0 : i32
    %c0_i32_0 = arith.constant 0 : i32
    return %arg0, %c0_i32 : i32, i32
  }
  func.func @transform_1(%arg0: i32) -> (i32, i32) {
    %c0_i32 = arith.constant 0 : i32
    %c0_i32_0 = arith.constant 0 : i32
    %c0_i32_1 = arith.constant 0 : i32
    return %c0_i32, %c0_i32_0 : i32, i32
  }
  func.func @transform_2(%arg0: i32) -> (i32, i32) {
    %c0_i32 = arith.constant 0 : i32
    %c0_i32_0 = arith.constant 0 : i32
    %c0_i32_1 = arith.constant 0 : i32
    return %c0_i32, %c0_i32_0 : i32, i32
  }
  func.func @transform_3(%arg0: i32) -> (i32, i32) {
    %c0_i32 = arith.constant 0 : i32
    %c0_i32_0 = arith.constant 0 : i32
    %c0_i32_1 = arith.constant 0 : i32
    return %c0_i32, %c0_i32_0 : i32, i32
  }
  func.func @transform_4(%arg0: i32) -> (i32, i32) {
    %c0_i32 = arith.constant 0 : i32
    %c0_i32_0 = arith.constant 0 : i32
    %c0_i32_1 = arith.constant 0 : i32
    return %c0_i32, %c0_i32_0 : i32, i32
  }
  func.func @transform_5(%arg0: i32) -> (i32, i32) {
    %c0_i32 = arith.constant 0 : i32
    %c0_i32_0 = arith.constant 0 : i32
    %c0_i32_1 = arith.constant 0 : i32
    return %c0_i32, %c0_i32_0 : i32, i32
  }
  func.func @transform_6(%arg0: i32) -> (i32, i32) {
    %c0_i32 = arith.constant 0 : i32
    %c0_i32_0 = arith.constant 0 : i32
    %c0_i32_1 = arith.constant 0 : i32
    return %c0_i32, %c0_i32_0 : i32, i32
  }
  func.func @transform_7(%arg0: i32) -> (i32, i32) {
    %c0_i32 = arith.constant 0 : i32
    %c0_i32_0 = arith.constant 0 : i32
    %c0_i32_1 = arith.constant 0 : i32
    return %c0_i32, %c0_i32_0 : i32, i32
  }
  func.func @transform_8(%arg0: i32) -> (i32, i32) {
    %c0_i32 = arith.constant 0 : i32
    %c0_i32_0 = arith.constant 0 : i32
    %c0_i32_1 = arith.constant 0 : i32
    return %c0_i32, %c0_i32_0 : i32, i32
  }
  func.func @transform_9(%arg0: i32) -> (i32, i32) {
    %c0_i32 = arith.constant 0 : i32
    %c0_i32_0 = arith.constant 0 : i32
    %c0_i32_1 = arith.constant 0 : i32
    return %c0_i32, %c0_i32_0 : i32, i32
  }
  func.func @transform_10(%arg0: i32) -> (i32, i32) {
    %c0_i32 = arith.constant 0 : i32
    %c0_i32_0 = arith.constant 0 : i32
    %c0_i32_1 = arith.constant 0 : i32
    return %c0_i32, %c0_i32_0 : i32, i32
  }
  func.func @transform_11(%arg0: i32) -> (i32, i32) {
    %c0_i32 = arith.constant 0 : i32
    %c0_i32_0 = arith.constant 0 : i32
    %c0_i32_1 = arith.constant 0 : i32
    return %c0_i32, %c0_i32_0 : i32, i32
  }
  func.func @transform_12(%arg0: i32) -> (i32, i32) {
    %c0_i32 = arith.constant 0 : i32
    %c0_i32_0 = arith.constant 0 : i32
    %c0_i32_1 = arith.constant 0 : i32
    return %c0_i32, %c0_i32_0 : i32, i32
  }
  func.func @transform_13(%arg0: i32) -> (i32, i32) {
    %c0_i32 = arith.constant 0 : i32
    %c0_i32_0 = arith.constant 0 : i32
    return %arg0, %c0_i32 : i32, i32
  }
  func.func @transform_14(%arg0: i32) -> (i32, i32) {
    %c0_i32 = arith.constant 0 : i32
    %c0_i32_0 = arith.constant 0 : i32
    return %arg0, %c0_i32 : i32, i32
  }
}

</mosaic_0001>

<llo_original>
// kernel: tpu_custom_call.1
$region0: #{tpu_custom_call.1}
  #allocation0 [shape = 'u32[]', space=smem, size = 0x4, offset = 0x4, fixed_abs, tag = 'smem constant byte address 0x4 - core index']
  #allocation1 [shape = 'u32[144,128]{1,0:T(1,128)}', space=vmem, size = 0x12000, scoped, tag = 'internal scratch']
  %s0 = inlined_call_operand.vmem [shape: bf16[16,896], index: 0, kind: input, shape index: {}]
  %s1 = inlined_call_operand.hbm [shape: bf16[896,128], index: 1, kind: input, shape index: {}]
  %s2 = inlined_call_operand.vmem [shape: f32[1,128], index: 2, kind: input, shape index: {}]
  %s3 = inlined_call_operand.vmem [shape: bf16[128,64], index: 3, kind: input, shape index: {}]
  %s4 = inlined_call_operand.vmem [shape: f32[1,64], index: 4, kind: input, shape index: {}]
  %s5 = inlined_call_operand.vmem [shape: bf16[64,128], index: 5, kind: input, shape index: {}]
  %s6 = inlined_call_operand.vmem [shape: f32[1,128], index: 6, kind: input, shape index: {}]
  %s7 = inlined_call_operand.vmem [shape: bf16[128,64], index: 7, kind: input, shape index: {}]
  %s8 = inlined_call_operand.vmem [shape: f32[1,64], index: 8, kind: input, shape index: {}]
  %s9 = inlined_call_operand.vmem [shape: bf16[64,128], index: 9, kind: input, shape index: {}]
  %s10 = inlined_call_operand.vmem [shape: f32[1,128], index: 10, kind: input, shape index: {}]
  %s11 = inlined_call_operand.hbm [shape: bf16[128,896], index: 11, kind: input, shape index: {}]
  %s12 = inlined_call_operand.vmem [shape: f32[1,896], index: 12, kind: input, shape index: {}]
  %s13 = inlined_call_operand.hbm [shape: f32[16,128], index: 13, kind: output, shape index: {0}]
  %s14 = inlined_call_operand.hbm [shape: bf16[16,896], index: 14, kind: output, shape index: {1}]
  %15 = xla_tuple %s13, %s14
  %s16 = sld [smem:[#allocation0]]
  $region101: #{tpu_custom_call.1} parent=0
    _
  %s18 = ssub.s32 1, %s16
  %s19 = scalar_select 0, %s18, %s16
  $region1: #{tpu_custom_call.1} parent=0
    #allocation2 [shape = 'u8[229376]{0}', space=vmem, size = 0x38000, scoped, tag = 'input window, operand 1, single buffered']
    #allocation3 [shape = 's32[2]{0}', space=sflag, size = 0x8, scoped, tag = 'scoped memory for tpu_custom_call.1']
    #allocation4 [shape = 's32[2]{0}', space=sflag, size = 0x8, scoped, tag = 'scoped memory for tpu_custom_call.1']
    #allocation5 [shape = 'u8[229376]{0}', space=vmem, size = 0x38000, scoped, tag = 'input window, operand 11, single buffered']
    #allocation6 [shape = 's32[1]{0}', space=sflag, size = 0x4, scoped, tag = 'scoped memory for tpu_custom_call.1']
    #allocation7 [shape = 'u8[8192]{0}', space=vmem, size = 0x2000, scoped, tag = 'output window, operand 0']
    #allocation8 [shape = 'u8[28672]{0}', space=vmem, size = 0x7000, scoped, tag = 'output window, operand 1']
    #allocation9 [shape = 's32[2]{0}', space=sflag, size = 0x8, scoped, tag = 'scoped memory for tpu_custom_call.1']
    %20 = vsyncpa [#allocation3], 0
    %21 = vsyncpa [#allocation6], 0
    %22 = vsyncpa [#allocation4], 0
    %s23 = scalar_lea.sflag [#allocation4], 1
    %24 = vsyncpa %s23, 0
    %25 = vsyncpa [#allocation9], 0
    %s26 = scalar_lea.sflag [#allocation9], 1
    %27 = vsyncpa %s26, 0
    loop: start=0, step=1, limit=4
    $region2: #{tpu_custom_call.1} parent=1 // loop_pre_header
      _
    $region3: #{tpu_custom_call.1} parent=1 // loop_header
      %s29 = sphi 0, %s33
      %p30 = scmp.ge.s32.totalorder %s29, 4
      %s39 = sphi 0, %s41
      %s42 = sphi 0, %s39
      %s43 = sphi 0, %s42
      %s59 = sphi 0, %s43
      %s63 = sphi 0, %s63
      %s65 = sphi 0, %s63
      %s66 = sphi 0, %s65
      %s80 = sphi 0, %s66
      %s84 = sphi 0, %s84
      %s86 = sphi 0, %s84
      %s87 = sphi 0, %s86
      %s101 = sphi 0, %s87
      %s105 = sphi 0, %s105
      %s107 = sphi 0, %s105
      %s108 = sphi 0, %s107
      %s122 = sphi 0, %s108
      %s126 = sphi 0, %s126
      %s128 = sphi 0, %s126
      %s129 = sphi 0, %s128
      %s143 = sphi 0, %s129
      %s147 = sphi 0, %s147
      %s149 = sphi 0, %s147
      %s150 = sphi 0, %s149
      %s164 = sphi 0, %s150
      %s168 = sphi 0, %s168
      %s170 = sphi 0, %s168
      %s171 = sphi 0, %s170
      %s185 = sphi 0, %s171
      %s189 = sphi 0, %s189
      %s191 = sphi 0, %s189
      %s192 = sphi 0, %s191
      %s206 = sphi 0, %s192
      %s210 = sphi 0, %s210
      %s212 = sphi 0, %s210
      %s213 = sphi 0, %s212
      %s227 = sphi 0, %s213
      %s231 = sphi 0, %s231
      %s233 = sphi 0, %s231
      %s234 = sphi 0, %s233
      %s248 = sphi 0, %s234
      %s252 = sphi 0, %s252
      %s254 = sphi 0, %s252
      %s255 = sphi 0, %s254
      %s269 = sphi 0, %s255
      %s273 = sphi 0, %s273
      %s275 = sphi 0, %s273
      %s276 = sphi 0, %s275
      %s290 = sphi 0, %s276
      %s294 = sphi 0, %s294
      %s296 = sphi 0, %s294
      %s297 = sphi 0, %s296
      %s311 = sphi 0, %s297
      %s317 = sphi 0, %s319
      %s320 = sphi 0, %s317
      %s321 = sphi 0, %s320
      %s337 = sphi 0, %s321
      %s343 = sphi 0, %s345
      %s346 = sphi 0, %s343
      %s347 = sphi 0, %s346
      %s363 = sphi 0, %s347
    $region4: #{tpu_custom_call.1} parent=1 // loop_header_branch
      %32 = sbr.rel (%p30) target = $region8
    $region5: #{tpu_custom_call.1} parent=1 // loop_body
      %s34 = ssub.s32 %s29, 1
      %s35 = ssub.s32 %s29, 2
      %s36 = sadd.s32 %s29, 1
      %s37 = ssub.s32 %s29, %s36
      %p38 = scmp.eq.s32.totalorder %s37, 0
      %s40 = sadd.s32 %s39, 1
      %s41 = scalar_select %p38, %s39, %s40
      %p44 = pneg %p38
      %p45 = scmp.eq.s32.totalorder %s29, 1
      %p46 = por %p44, %p45
      %p47 = scmp.ne.s32.totalorder %s39, %s42
      %p48 = scmp.eq.s32.totalorder %s29, 0
      %p49 = por %p47, %p48
      %p50 = scmp.ne.s32.totalorder %s39, %s42
      %p51 = scmp.eq.s32.totalorder %s34, 1
      %p52 = por %p50, %p51
      %p53 = scmp.ne.s32.totalorder %s42, %s43
      %p54 = scmp.eq.s32.totalorder %s34, 0
      %p55 = por %p53, %p54
      %p56 = scmp.ne.s32.totalorder %s42, %s43
      %p57 = scmp.eq.s32.totalorder %s35, 1
      %p58 = por %p56, %p57
      %p60 = scmp.ne.s32.totalorder %s43, %s59
      %p61 = scmp.eq.s32.totalorder %s35, 0
      %p62 = por %p60, %p61
      %s64 = sadd.s32 %s63, 1
      %p67 = scmp.eq.s32.totalorder %s29, 1
      %p68 = scmp.ne.s32.totalorder %s63, %s65
      %p69 = scmp.eq.s32.totalorder %s29, 0
      %p70 = por %p68, %p69
      %p71 = scmp.ne.s32.totalorder %s63, %s65
      %p72 = scmp.eq.s32.totalorder %s34, 1
      %p73 = por %p71, %p72
      %p74 = scmp.ne.s32.totalorder %s65, %s66
      %p75 = scmp.eq.s32.totalorder %s34, 0
      %p76 = por %p74, %p75
      %p77 = scmp.ne.s32.totalorder %s65, %s66
      %p78 = scmp.eq.s32.totalorder %s35, 1
      %p79 = por %p77, %p78
      %p81 = scmp.ne.s32.totalorder %s66, %s80
      %p82 = scmp.eq.s32.totalorder %s35, 0
      %p83 = por %p81, %p82
      %s85 = sadd.s32 %s84, 1
      %p88 = scmp.eq.s32.totalorder %s29, 1
      %p89 = scmp.ne.s32.totalorder %s84, %s86
      %p90 = scmp.eq.s32.totalorder %s29, 0
      %p91 = por %p89, %p90
      %p92 = scmp.ne.s32.totalorder %s84, %s86
      %p93 = scmp.eq.s32.totalorder %s34, 1
      %p94 = por %p92, %p93
      %p95 = scmp.ne.s32.totalorder %s86, %s87
      %p96 = scmp.eq.s32.totalorder %s34, 0
      %p97 = por %p95, %p96
      %p98 = scmp.ne.s32.totalorder %s86, %s87
      %p99 = scmp.eq.s32.totalorder %s35, 1
      %p100 = por %p98, %p99
      %p102 = scmp.ne.s32.totalorder %s87, %s101
      %p103 = scmp.eq.s32.totalorder %s35, 0
      %p104 = por %p102, %p103
      %s106 = sadd.s32 %s105, 1
      %p109 = scmp.eq.s32.totalorder %s29, 1
      %p110 = scmp.ne.s32.totalorder %s105, %s107
      %p111 = scmp.eq.s32.totalorder %s29, 0
      %p112 = por %p110, %p111
      %p113 = scmp.ne.s32.totalorder %s105, %s107
      %p114 = scmp.eq.s32.totalorder %s34, 1
      %p115 = por %p113, %p114
      %p116 = scmp.ne.s32.totalorder %s107, %s108
      %p117 = scmp.eq.s32.totalorder %s34, 0
      %p118 = por %p116, %p117
      %p119 = scmp.ne.s32.totalorder %s107, %s108
      %p120 = scmp.eq.s32.totalorder %s35, 1
      %p121 = por %p119, %p120
      %p123 = scmp.ne.s32.totalorder %s108, %s122
      %p124 = scmp.eq.s32.totalorder %s35, 0
      %p125 = por %p123, %p124
      %s127 = sadd.s32 %s126, 1
      %p130 = scmp.eq.s32.totalorder %s29, 1
      %p131 = scmp.ne.s32.totalorder %s126, %s128
      %p132 = scmp.eq.s32.totalorder %s29, 0
      %p133 = por %p131, %p132
      %p134 = scmp.ne.s32.totalorder %s126, %s128
      %p135 = scmp.eq.s32.totalorder %s34, 1
      %p136 = por %p134, %p135
      %p137 = scmp.ne.s32.totalorder %s128, %s129
      %p138 = scmp.eq.s32.totalorder %s34, 0
      %p139 = por %p137, %p138
      %p140 = scmp.ne.s32.totalorder %s128, %s129
      %p141 = scmp.eq.s32.totalorder %s35, 1
      %p142 = por %p140, %p141
      %p144 = scmp.ne.s32.totalorder %s129, %s143
      %p145 = scmp.eq.s32.totalorder %s35, 0
      %p146 = por %p144, %p145
      %s148 = sadd.s32 %s147, 1
      %p151 = scmp.eq.s32.totalorder %s29, 1
      %p152 = scmp.ne.s32.totalorder %s147, %s149
      %p153 = scmp.eq.s32.totalorder %s29, 0
      %p154 = por %p152, %p153
      %p155 = scmp.ne.s32.totalorder %s147, %s149
      %p156 = scmp.eq.s32.totalorder %s34, 1
      %p157 = por %p155, %p156
      %p158 = scmp.ne.s32.totalorder %s149, %s150
      %p159 = scmp.eq.s32.totalorder %s34, 0
      %p160 = por %p158, %p159
      %p161 = scmp.ne.s32.totalorder %s149, %s150
      %p162 = scmp.eq.s32.totalorder %s35, 1
      %p163 = por %p161, %p162
      %p165 = scmp.ne.s32.totalorder %s150, %s164
      %p166 = scmp.eq.s32.totalorder %s35, 0
      %p167 = por %p165, %p166
      %s169 = sadd.s32 %s168, 1
      %p172 = scmp.eq.s32.totalorder %s29, 1
      %p173 = scmp.ne.s32.totalorder %s168, %s170
      %p174 = scmp.eq.s32.totalorder %s29, 0
      %p175 = por %p173, %p174
      %p176 = scmp.ne.s32.totalorder %s168, %s170
      %p177 = scmp.eq.s32.totalorder %s34, 1
      %p178 = por %p176, %p177
      %p179 = scmp.ne.s32.totalorder %s170, %s171
      %p180 = scmp.eq.s32.totalorder %s34, 0
      %p181 = por %p179, %p180
      %p182 = scmp.ne.s32.totalorder %s170, %s171
      %p183 = scmp.eq.s32.totalorder %s35, 1
      %p184 = por %p182, %p183
      %p186 = scmp.ne.s32.totalorder %s171, %s185
      %p187 = scmp.eq.s32.totalorder %s35, 0
      %p188 = por %p186, %p187
      %s190 = sadd.s32 %s189, 1
      %p193 = scmp.eq.s32.totalorder %s29, 1
      %p194 = scmp.ne.s32.totalorder %s189, %s191
      %p195 = scmp.eq.s32.totalorder %s29, 0
      %p196 = por %p194, %p195
      %p197 = scmp.ne.s32.totalorder %s189, %s191
      %p198 = scmp.eq.s32.totalorder %s34, 1
      %p199 = por %p197, %p198
      %p200 = scmp.ne.s32.totalorder %s191, %s192
      %p201 = scmp.eq.s32.totalorder %s34, 0
      %p202 = por %p200, %p201
      %p203 = scmp.ne.s32.totalorder %s191, %s192
      %p204 = scmp.eq.s32.totalorder %s35, 1
      %p205 = por %p203, %p204
      %p207 = scmp.ne.s32.totalorder %s192, %s206
      %p208 = scmp.eq.s32.totalorder %s35, 0
      %p209 = por %p207, %p208
      %s211 = sadd.s32 %s210, 1
      %p214 = scmp.eq.s32.totalorder %s29, 1
      %p215 = scmp.ne.s32.totalorder %s210, %s212
      %p216 = scmp.eq.s32.totalorder %s29, 0
      %p217 = por %p215, %p216
      %p218 = scmp.ne.s32.totalorder %s210, %s212
      %p219 = scmp.eq.s32.totalorder %s34, 1
      %p220 = por %p218, %p219
      %p221 = scmp.ne.s32.totalorder %s212, %s213
      %p222 = scmp.eq.s32.totalorder %s34, 0
      %p223 = por %p221, %p222
      %p224 = scmp.ne.s32.totalorder %s212, %s213
      %p225 = scmp.eq.s32.totalorder %s35, 1
      %p226 = por %p224, %p225
      %p228 = scmp.ne.s32.totalorder %s213, %s227
      %p229 = scmp.eq.s32.totalorder %s35, 0
      %p230 = por %p228, %p229
      %s232 = sadd.s32 %s231, 1
      %p235 = scmp.eq.s32.totalorder %s29, 1
      %p236 = scmp.ne.s32.totalorder %s231, %s233
      %p237 = scmp.eq.s32.totalorder %s29, 0
      %p238 = por %p236, %p237
      %p239 = scmp.ne.s32.totalorder %s231, %s233
      %p240 = scmp.eq.s32.totalorder %s34, 1
      %p241 = por %p239, %p240
      %p242 = scmp.ne.s32.totalorder %s233, %s234
      %p243 = scmp.eq.s32.totalorder %s34, 0
      %p244 = por %p242, %p243
      %p245 = scmp.ne.s32.totalorder %s233, %s234
      %p246 = scmp.eq.s32.totalorder %s35, 1
      %p247 = por %p245, %p246
      %p249 = scmp.ne.s32.totalorder %s234, %s248
      %p250 = scmp.eq.s32.totalorder %s35, 0
      %p251 = por %p249, %p250
      %s253 = sadd.s32 %s252, 1
      %p256 = scmp.eq.s32.totalorder %s29, 1
      %p257 = scmp.ne.s32.totalorder %s252, %s254
      %p258 = scmp.eq.s32.totalorder %s29, 0
      %p259 = por %p257, %p258
      %p260 = scmp.ne.s32.totalorder %s252, %s254
      %p261 = scmp.eq.s32.totalorder %s34, 1
      %p262 = por %p260, %p261
      %p263 = scmp.ne.s32.totalorder %s254, %s255
      %p264 = scmp.eq.s32.totalorder %s34, 0
      %p265 = por %p263, %p264
      %p266 = scmp.ne.s32.totalorder %s254, %s255
      %p267 = scmp.eq.s32.totalorder %s35, 1
      %p268 = por %p266, %p267
      %p270 = scmp.ne.s32.totalorder %s255, %s269
      %p271 = scmp.eq.s32.totalorder %s35, 0
      %p272 = por %p270, %p271
      %s274 = sadd.s32 %s273, 1
      %p277 = scmp.eq.s32.totalorder %s29, 1
      %p278 = scmp.ne.s32.totalorder %s273, %s275
      %p279 = scmp.eq.s32.totalorder %s29, 0
      %p280 = por %p278, %p279
      %p281 = scmp.ne.s32.totalorder %s273, %s275
      %p282 = scmp.eq.s32.totalorder %s34, 1
      %p283 = por %p281, %p282
      %p284 = scmp.ne.s32.totalorder %s275, %s276
      %p285 = scmp.eq.s32.totalorder %s34, 0
      %p286 = por %p284, %p285
      %p287 = scmp.ne.s32.totalorder %s275, %s276
      %p288 = scmp.eq.s32.totalorder %s35, 1
      %p289 = por %p287, %p288
      %p291 = scmp.ne.s32.totalorder %s276, %s290
      %p292 = scmp.eq.s32.totalorder %s35, 0
      %p293 = por %p291, %p292
      %s295 = sadd.s32 %s294, 1
      %p298 = scmp.eq.s32.totalorder %s29, 1
      %p299 = scmp.ne.s32.totalorder %s294, %s296
      %p300 = scmp.eq.s32.totalorder %s29, 0
      %p301 = por %p299, %p300
      %p302 = scmp.ne.s32.totalorder %s294, %s296
      %p303 = scmp.eq.s32.totalorder %s34, 1
      %p304 = por %p302, %p303
      %p305 = scmp.ne.s32.totalorder %s296, %s297
      %p306 = scmp.eq.s32.totalorder %s34, 0
      %p307 = por %p305, %p306
      %p308 = scmp.ne.s32.totalorder %s296, %s297
      %p309 = scmp.eq.s32.totalorder %s35, 1
      %p310 = por %p308, %p309
      %p312 = scmp.ne.s32.totalorder %s297, %s311
      %p313 = scmp.eq.s32.totalorder %s35, 0
      %p314 = por %p312, %p313
      %s315 = ssub.s32 %s29, %s36
      %p316 = scmp.eq.s32.totalorder %s315, 0
      %s318 = sadd.s32 %s317, 1
      %s319 = scalar_select %p316, %s317, %s318
      %p322 = pneg %p316
      %p323 = scmp.eq.s32.totalorder %s29, 1
      %p324 = por %p322, %p323
      %p325 = scmp.ne.s32.totalorder %s317, %s320
      %p326 = scmp.eq.s32.totalorder %s29, 0
      %p327 = por %p325, %p326
      %p328 = scmp.ne.s32.totalorder %s317, %s320
      %p329 = scmp.eq.s32.totalorder %s34, 1
      %p330 = por %p328, %p329
      %p331 = scmp.ne.s32.totalorder %s320, %s321
      %p332 = scmp.eq.s32.totalorder %s34, 0
      %p333 = por %p331, %p332
      %p334 = scmp.ne.s32.totalorder %s320, %s321
      %p335 = scmp.eq.s32.totalorder %s35, 1
      %p336 = por %p334, %p335
      %p338 = scmp.ne.s32.totalorder %s321, %s337
      %p339 = scmp.eq.s32.totalorder %s35, 0
      %p340 = por %p338, %p339
      %s341 = ssub.s32 %s29, %s36
      %p342 = scmp.eq.s32.totalorder %s341, 0
      %s344 = sadd.s32 %s343, 1
      %s345 = scalar_select %p342, %s343, %s344
      %p348 = pneg %p342
      %p349 = scmp.eq.s32.totalorder %s29, 1
      %p350 = por %p348, %p349
      %p351 = scmp.ne.s32.totalorder %s343, %s346
      %p352 = scmp.eq.s32.totalorder %s29, 0
      %p353 = por %p351, %p352
      %p354 = scmp.ne.s32.totalorder %s343, %s346
      %p355 = scmp.eq.s32.totalorder %s34, 1
      %p356 = por %p354, %p355
      %p357 = scmp.ne.s32.totalorder %s346, %s347
      %p358 = scmp.eq.s32.totalorder %s34, 0
      %p359 = por %p357, %p358
      %p360 = scmp.ne.s32.totalorder %s346, %s347
      %p361 = scmp.eq.s32.totalorder %s35, 1
      %p362 = por %p360, %p361
      %p364 = scmp.ne.s32.totalorder %s347, %s363
      %p365 = scmp.eq.s32.totalorder %s35, 0
      %p366 = por %p364, %p365
      %p367 = scmp.le.s32.totalorder 1, %s29
      %p368 = scmp.lt.s32.totalorder %s29, 3
      %p369 = pnand %p367, %p368
      %p370 = pneg %p369
      // Predicated region
      $region9: #{tpu_custom_call.1} parent=5 // pred_check
        _
      $region10: #{tpu_custom_call.1} parent=5 // pred_check_branch
        %372 = sbr.rel (%p369) target = $region12
      $region11: #{tpu_custom_call.1} parent=5 // pred_region
        %s373 = ssub.s32 %s29, 1
        // Predicated region
        $region13: #{tpu_custom_call.1} parent=11 // pred_check
          %p374 = pneg %p76
        $region14: #{tpu_custom_call.1} parent=11 // pred_check_branch
          %376 = sbr.rel (%p374) target = $region16
        $region15: #{tpu_custom_call.1} parent=11 // pred_region
          %s378 = ssub.s32 7168, 7168
          %379 = vsyncadd [#allocation3], %s378
          %s380 = sshll.u32 [#allocation2], 4
          %s381 = int_to_ptr.vmem [resolvable:$true] %s380
          %386 = dma.hbm_to_vmem [thread:$0]  %s1, 7168, %s381, [#allocation3], 64, 64, 4
        $region16: #{tpu_custom_call.1} parent=11 // pred_fallthru
          _
        // Predicated region
        $region17: #{tpu_custom_call.1} parent=11 // pred_check
          %p387 = pneg %p97
        $region18: #{tpu_custom_call.1} parent=11 // pred_check_branch
          %389 = sbr.rel (%p387) target = $region20
        $region19: #{tpu_custom_call.1} parent=11 // pred_region
          _
        $region20: #{tpu_custom_call.1} parent=11 // pred_fallthru
          _
        // Predicated region
        $region21: #{tpu_custom_call.1} parent=11 // pred_check
          %p390 = pneg %p118
        $region22: #{tpu_custom_call.1} parent=11 // pred_check_branch
          %392 = sbr.rel (%p390) target = $region24
        $region23: #{tpu_custom_call.1} parent=11 // pred_region
          _
        $region24: #{tpu_custom_call.1} parent=11 // pred_fallthru
          _
        // Predicated region
        $region25: #{tpu_custom_call.1} parent=11 // pred_check
          %p393 = pneg %p139
        $region26: #{tpu_custom_call.1} parent=11 // pred_check_branch
          %395 = sbr.rel (%p393) target = $region28
        $region27: #{tpu_custom_call.1} parent=11 // pred_region
          _
        $region28: #{tpu_custom_call.1} parent=11 // pred_fallthru
          _
        // Predicated region
        $region29: #{tpu_custom_call.1} parent=11 // pred_check
          %p396 = pneg %p160
        $region30: #{tpu_custom_call.1} parent=11 // pred_check_branch
          %398 = sbr.rel (%p396) target = $region32
        $region31: #{tpu_custom_call.1} parent=11 // pred_region
          _
        $region32: #{tpu_custom_call.1} parent=11 // pred_fallthru
          _
        // Predicated region
        $region33: #{tpu_custom_call.1} parent=11 // pred_check
          %p399 = pneg %p181
        $region34: #{tpu_custom_call.1} parent=11 // pred_check_branch
          %401 = sbr.rel (%p399) target = $region36
        $region35: #{tpu_custom_call.1} parent=11 // pred_region
          _
        $region36: #{tpu_custom_call.1} parent=11 // pred_fallthru
          _
        // Predicated region
        $region37: #{tpu_custom_call.1} parent=11 // pred_check
          %p402 = pneg %p202
        $region38: #{tpu_custom_call.1} parent=11 // pred_check_branch
          %404 = sbr.rel (%p402) target = $region40
        $region39: #{tpu_custom_call.1} parent=11 // pred_region
          _
        $region40: #{tpu_custom_call.1} parent=11 // pred_fallthru
          _
        // Predicated region
        $region41: #{tpu_custom_call.1} parent=11 // pred_check
          %p405 = pneg %p223
        $region42: #{tpu_custom_call.1} parent=11 // pred_check_branch
          %407 = sbr.rel (%p405) target = $region44
        $region43: #{tpu_custom_call.1} parent=11 // pred_region
          _
        $region44: #{tpu_custom_call.1} parent=11 // pred_fallthru
          _
        // Predicated region
        $region45: #{tpu_custom_call.1} parent=11 // pred_check
          %p408 = pneg %p244
        $region46: #{tpu_custom_call.1} parent=11 // pred_check_branch
          %410 = sbr.rel (%p408) target = $region48
        $region47: #{tpu_custom_call.1} parent=11 // pred_region
          _
        $region48: #{tpu_custom_call.1} parent=11 // pred_fallthru
          _
        // Predicated region
        $region49: #{tpu_custom_call.1} parent=11 // pred_check
          %p411 = pneg %p265
        $region50: #{tpu_custom_call.1} parent=11 // pred_check_branch
          %413 = sbr.rel (%p411) target = $region52
        $region51: #{tpu_custom_call.1} parent=11 // pred_region
          _
        $region52: #{tpu_custom_call.1} parent=11 // pred_fallthru
          _
        // Predicated region
        $region53: #{tpu_custom_call.1} parent=11 // pred_check
          %p414 = pneg %p286
        $region54: #{tpu_custom_call.1} parent=11 // pred_check_branch
          %416 = sbr.rel (%p414) target = $region56
        $region55: #{tpu_custom_call.1} parent=11 // pred_region
          %s418 = ssub.s32 7168, 7168
          %419 = vsyncadd [#allocation6], %s418
          %s420 = sshll.u32 [#allocation5], 4
          %s421 = int_to_ptr.vmem [resolvable:$true] %s420
          %426 = dma.hbm_to_vmem [thread:$0]  %s11, 7168, %s421, [#allocation6], 448, 448, 28
        $region56: #{tpu_custom_call.1} parent=11 // pred_fallthru
          _
        // Predicated region
        $region57: #{tpu_custom_call.1} parent=11 // pred_check
          %p427 = pneg %p307
        $region58: #{tpu_custom_call.1} parent=11 // pred_check_branch
          %429 = sbr.rel (%p427) target = $region60
        $region59: #{tpu_custom_call.1} parent=11 // pred_region
          _
        $region60: #{tpu_custom_call.1} parent=11 // pred_fallthru
          _
      $region12: #{tpu_custom_call.1} parent=5 // pred_fallthru
        _
      %p430 = scmp.lt.s32.totalorder %s29, 2
      // Predicated region
      $region61: #{tpu_custom_call.1} parent=5 // pred_check
        %p431 = pneg %p430
      $region62: #{tpu_custom_call.1} parent=5 // pred_check_branch
        %433 = sbr.rel (%p431) target = $region64
      $region63: #{tpu_custom_call.1} parent=5 // pred_region
        // Predicated region
        $region65: #{tpu_custom_call.1} parent=63 // pred_check
          %p434 = pneg %p49
        $region66: #{tpu_custom_call.1} parent=63 // pred_check_branch
          %436 = sbr.rel (%p434) target = $region68
        $region67: #{tpu_custom_call.1} parent=63 // pred_region
          %p437 = scmp.lt.s32.totalorder %s29, 1
          %s438 = scalar_select %p437, %s29, 1
          %s439 = smul.addr %s438, 7
          %s440 = smul.addr %s439, 4
          %s441 = scalar_lea.vmem %s0, %s440
        $region68: #{tpu_custom_call.1} parent=63 // pred_fallthru
          _
      $region64: #{tpu_custom_call.1} parent=5 // pred_fallthru
        _
      %p442 = scmp.le.s32.totalorder 1, %s29
      %p443 = scmp.lt.s32.totalorder %s29, 3
      %p444 = pnand %p442, %p443
      %p445 = pneg %p444
      // Predicated region
      $region69: #{tpu_custom_call.1} parent=5 // pred_check
        _
      $region70: #{tpu_custom_call.1} parent=5 // pred_check_branch
        %447 = sbr.rel (%p444) target = $region72
      $region71: #{tpu_custom_call.1} parent=5 // pred_region
        %s448 = ssub.s32 %s29, 1
        // Predicated region
        $region73: #{tpu_custom_call.1} parent=71 // pred_check
          %p449 = pneg %p76
        $region74: #{tpu_custom_call.1} parent=71 // pred_check_branch
          %451 = sbr.rel (%p449) target = $region76
        $region75: #{tpu_custom_call.1} parent=71 // pred_region
          %452 = dma.done [#allocation3], 7168
        $region76: #{tpu_custom_call.1} parent=71 // pred_fallthru
          _
        // Predicated region
        $region77: #{tpu_custom_call.1} parent=71 // pred_check
          %p453 = pneg %p286
        $region78: #{tpu_custom_call.1} parent=71 // pred_check_branch
          %455 = sbr.rel (%p453) target = $region80
        $region79: #{tpu_custom_call.1} parent=71 // pred_region
          %456 = dma.done [#allocation6], 7168
        $region80: #{tpu_custom_call.1} parent=71 // pred_fallthru
          _
        %p457 = scmp.lt.s32.totalorder %s34, 1
        %s458 = scalar_select %p457, %s34, 1
        %s459 = smul.addr %s458, 7
        %s460 = smul.addr %s459, 4
        %s461 = scalar_lea.vmem %s0, %s460
        %p462 = pneg %p55
        %p463 = pneg %p52
        %p464 = pneg %p76
        %p465 = pneg %p73
        %p466 = pneg %p97
        %p467 = pneg %p94
        %p468 = pneg %p118
        %p469 = pneg %p115
        %p470 = pneg %p139
        %p471 = pneg %p136
        %p472 = pneg %p160
        %p473 = pneg %p157
        %p474 = pneg %p181
        %p475 = pneg %p178
        %p476 = pneg %p202
        %p477 = pneg %p199
        %p478 = pneg %p223
        %p479 = pneg %p220
        %p480 = pneg %p244
        %p481 = pneg %p241
        %p482 = pneg %p265
        %p483 = pneg %p262
        %p484 = pneg %p286
        %p485 = pneg %p283
        %p486 = pneg %p307
        %p487 = pneg %p304
        %p488 = pneg %p333
        %p489 = pneg %p330
        %s490 = sand.u32 %s320, 1
        %s491 = scalar_lea.sflag [#allocation4], %s490
        %s492 = sand.u32 %s320, 1
        %s493 = smul.addr %s492, 8
        %s494 = scalar_lea.vmem [#allocation7], %s493
        %p495 = pneg %p359
        %p496 = pneg %p356
        %s497 = sand.u32 %s346, 1
        %s498 = scalar_lea.sflag [#allocation9], %s497
        %s499 = sand.u32 %s346, 1
        %s500 = smul.addr %s499, 28
        %s501 = scalar_lea.vmem [#allocation8], %s500
        %p502 = scmp.lt.s32.totalorder %s34, 1
        %s503 = scalar_select %p502, %s34, 1
        %s504 = smul.addr %s503, 7
        %s505 = smul.addr %s504, 4
        %s506 = scalar_lea.vmem %s0, %s505
        %v508 = vld [vmem:[%s506] sm:$0xff]
        %v509 = vld [vmem:[%s506 + $0x8] sm:$0xff]
        %v510 = vld [vmem:[%s506 + $0x10] sm:$0xff]
        %v511 = vld [vmem:[%s506 + $0x18] sm:$0xf]
        %v512 = vld [vmem:[#allocation2] sm:$0xf]
        %v513 = vld [vmem:[#allocation2 + $0x4] sm:$0xf]
        %v514 = vld [vmem:[#allocation2 + $0x8] sm:$0xf]
        %v515 = vld [vmem:[#allocation2 + $0xc] sm:$0xf]
        %v516 = vld [vmem:[#allocation2 + $0x10] sm:$0xf]
        %v517 = vld [vmem:[#allocation2 + $0x14] sm:$0xf]
        %v518 = vld [vmem:[#allocation2 + $0x18] sm:$0xf]
        %v519 = vld [vmem:[#allocation2 + $0x1c] sm:$0xf]
        %v520 = vld [vmem:[#allocation2 + $0x20] sm:$0xf]
        %v521 = vld [vmem:[#allocation2 + $0x24] sm:$0xf]
        %v522 = vld [vmem:[#allocation2 + $0x28] sm:$0xf]
        %v523 = vld [vmem:[#allocation2 + $0x2c] sm:$0xf]
        %v524 = vld [vmem:[#allocation2 + $0x30] sm:$0xf]
        %v525 = vld [vmem:[#allocation2 + $0x34] sm:$0xf]
        %v526 = vld [vmem:[#allocation2 + $0x38] sm:$0xf]
        %v527 = vld [vmem:[#allocation2 + $0x3c] sm:$0xf]
        %v528 = vld [vmem:[#allocation2 + $0x40] sm:$0xf]
        %v529 = vld [vmem:[#allocation2 + $0x44] sm:$0xf]
        %v530 = vld [vmem:[#allocation2 + $0x48] sm:$0xf]
        %v531 = vld [vmem:[#allocation2 + $0x4c] sm:$0xf]
        %v532 = vld [vmem:[#allocation2 + $0x50] sm:$0xf]
        %v533 = vld [vmem:[#allocation2 + $0x54] sm:$0xf]
        %v534 = vld [vmem:[#allocation2 + $0x58] sm:$0xf]
        %v535 = vld [vmem:[#allocation2 + $0x5c] sm:$0xf]
        %v536 = vld [vmem:[#allocation2 + $0x60] sm:$0xf]
        %v537 = vld [vmem:[#allocation2 + $0x64] sm:$0xf]
        %v538 = vld [vmem:[#allocation2 + $0x68] sm:$0xf]
        %v539 = vld [vmem:[#allocation2 + $0x6c] sm:$0xf]
        %v540 = vld [vmem:[#allocation2 + $0x70] sm:$0xf]
        %v541 = vld [vmem:[#allocation2 + $0x74] sm:$0xf]
        %v542 = vld [vmem:[#allocation2 + $0x78] sm:$0xf]
        %v543 = vld [vmem:[#allocation2 + $0x7c] sm:$0xf]
        %v544 = vld [vmem:[#allocation2 + $0x80] sm:$0xf]
        %v545 = vld [vmem:[#allocation2 + $0x84] sm:$0xf]
        %v546 = vld [vmem:[#allocation2 + $0x88] sm:$0xf]
        %v547 = vld [vmem:[#allocation2 + $0x8c] sm:$0xf]
        %v548 = vld [vmem:[#allocation2 + $0x90] sm:$0xf]
        %v549 = vld [vmem:[#allocation2 + $0x94] sm:$0xf]
        %v550 = vld [vmem:[#allocation2 + $0x98] sm:$0xf]
        %v551 = vld [vmem:[#allocation2 + $0x9c] sm:$0xf]
        %v552 = vld [vmem:[#allocation2 + $0xa0] sm:$0xf]
        %v553 = vld [vmem:[#allocation2 + $0xa4] sm:$0xf]
        %v554 = vld [vmem:[#allocation2 + $0xa8] sm:$0xf]
        %v555 = vld [vmem:[#allocation2 + $0xac] sm:$0xf]
        %v556 = vld [vmem:[#allocation2 + $0xb0] sm:$0xf]
        %v557 = vld [vmem:[#allocation2 + $0xb4] sm:$0xf]
        %v558 = vld [vmem:[#allocation2 + $0xb8] sm:$0xf]
        %v559 = vld [vmem:[#allocation2 + $0xbc] sm:$0xf]
        %v560 = vld [vmem:[#allocation2 + $0xc0] sm:$0xf]
        %v561 = vld [vmem:[#allocation2 + $0xc4] sm:$0xf]
        %v562 = vld [vmem:[#allocation2 + $0xc8] sm:$0xf]
        %v563 = vld [vmem:[#allocation2 + $0xcc] sm:$0xf]
        %v564 = vld [vmem:[#allocation2 + $0xd0] sm:$0xf]
        %v565 = vld [vmem:[#allocation2 + $0xd4] sm:$0xf]
        %v566 = vld [vmem:[#allocation2 + $0xd8] sm:$0xf]
        %v567 = vld [vmem:[#allocation2 + $0xdc] sm:$0xf]
        %v568 = vld [vmem:[#allocation2 + $0xe0] sm:$0xf]
        %v569 = vld [vmem:[#allocation2 + $0xe4] sm:$0xf]
        %v570 = vld [vmem:[#allocation2 + $0xe8] sm:$0xf]
        %v571 = vld [vmem:[#allocation2 + $0xec] sm:$0xf]
        %v572 = vld [vmem:[#allocation2 + $0xf0] sm:$0xf]
        %v573 = vld [vmem:[#allocation2 + $0xf4] sm:$0xf]
        %v574 = vld [vmem:[#allocation2 + $0xf8] sm:$0xf]
        %v575 = vld [vmem:[#allocation2 + $0xfc] sm:$0xf]
        %v576 = vld [vmem:[#allocation2 + $0x100] sm:$0xf]
        %v577 = vld [vmem:[#allocation2 + $0x104] sm:$0xf]
        %v578 = vld [vmem:[#allocation2 + $0x108] sm:$0xf]
        %v579 = vld [vmem:[#allocation2 + $0x10c] sm:$0xf]
        %v580 = vld [vmem:[#allocation2 + $0x110] sm:$0xf]
        %v581 = vld [vmem:[#allocation2 + $0x114] sm:$0xf]
        %v582 = vld [vmem:[#allocation2 + $0x118] sm:$0xf]
        %v583 = vld [vmem:[#allocation2 + $0x11c] sm:$0xf]
        %v584 = vld [vmem:[#allocation2 + $0x120] sm:$0xf]
        %v585 = vld [vmem:[#allocation2 + $0x124] sm:$0xf]
        %v586 = vld [vmem:[#allocation2 + $0x128] sm:$0xf]
        %v587 = vld [vmem:[#allocation2 + $0x12c] sm:$0xf]
        %v588 = vld [vmem:[#allocation2 + $0x130] sm:$0xf]
        %v589 = vld [vmem:[#allocation2 + $0x134] sm:$0xf]
        %v590 = vld [vmem:[#allocation2 + $0x138] sm:$0xf]
        %v591 = vld [vmem:[#allocation2 + $0x13c] sm:$0xf]
        %v592 = vld [vmem:[#allocation2 + $0x140] sm:$0xf]
        %v593 = vld [vmem:[#allocation2 + $0x144] sm:$0xf]
        %v594 = vld [vmem:[#allocation2 + $0x148] sm:$0xf]
        %v595 = vld [vmem:[#allocation2 + $0x14c] sm:$0xf]
        %v596 = vld [vmem:[#allocation2 + $0x150] sm:$0xf]
        %v597 = vld [vmem:[#allocation2 + $0x154] sm:$0xf]
        %v598 = vld [vmem:[#allocation2 + $0x158] sm:$0xf]
        %v599 = vld [vmem:[#allocation2 + $0x15c] sm:$0xf]
        %v600 = vld [vmem:[#allocation2 + $0x160] sm:$0xf]
        %v601 = vld [vmem:[#allocation2 + $0x164] sm:$0xf]
        %v602 = vld [vmem:[#allocation2 + $0x168] sm:$0xf]
        %v603 = vld [vmem:[#allocation2 + $0x16c] sm:$0xf]
        %v604 = vld [vmem:[#allocation2 + $0x170] sm:$0xf]
        %v605 = vld [vmem:[#allocation2 + $0x174] sm:$0xf]
        %v606 = vld [vmem:[#allocation2 + $0x178] sm:$0xf]
        %v607 = vld [vmem:[#allocation2 + $0x17c] sm:$0xf]
        %v608 = vld [vmem:[#allocation2 + $0x180] sm:$0xf]
        %v609 = vld [vmem:[#allocation2 + $0x184] sm:$0xf]
        %v610 = vld [vmem:[#allocation2 + $0x188] sm:$0xf]
        %v611 = vld [vmem:[#allocation2 + $0x18c] sm:$0xf]
        %v612 = vld [vmem:[#allocation2 + $0x190] sm:$0xf]
        %v613 = vld [vmem:[#allocation2 + $0x194] sm:$0xf]
        %v614 = vld [vmem:[#allocation2 + $0x198] sm:$0xf]
        %v615 = vld [vmem:[#allocation2 + $0x19c] sm:$0xf]
        %v616 = vld [vmem:[#allocation2 + $0x1a0] sm:$0xf]
        %v617 = vld [vmem:[#allocation2 + $0x1a4] sm:$0xf]
        %v618 = vld [vmem:[#allocation2 + $0x1a8] sm:$0xf]
        %v619 = vld [vmem:[#allocation2 + $0x1ac] sm:$0xf]
        %v620 = vld [vmem:[#allocation2 + $0x1b0] sm:$0xf]
        %v621 = vld [vmem:[#allocation2 + $0x1b4] sm:$0xf]
        %v622 = vld [vmem:[#allocation2 + $0x1b8] sm:$0xf]
        %v623 = vld [vmem:[#allocation2 + $0x1bc] sm:$0xf]
        %v624 = vld [vmem:[%s2] sm:$0x1]
        %v626 = vlaneseq
        %v627 = vshrl.u32 %v626, 7
        %v628 = vsub.s32 0, %v627
        %v629 = vrot.slane %v624, %v628
        %v635 = vunpack.c.l.b16 %v508
        %v636 = vunpack.c.h.b16 %v508
        %v637 = vunpack.c.l.b16 %v509
        %v638 = vunpack.c.h.b16 %v509
        %v639 = vunpack.c.l.b16 %v510
        %v640 = vunpack.c.h.b16 %v510
        %v641 = vunpack.c.l.b16 %v511
        %v642 = vpack.c.b16 %v635, %v635
        %v643 = vpack.c.b16 %v636, %v636
        %v644 = vpack.c.b16 %v637, %v637
        %v645 = vpack.c.b16 %v638, %v638
        %v646 = vpack.c.b16 %v639, %v639
        %v647 = vpack.c.b16 %v640, %v640
        %v648 = vpack.c.b16 %v641, %v641
        %v768 = vunpack.c.l.b16 %v512
        %v769 = vunpack.c.l.b16 %v513
        %v770 = vunpack.c.l.b16 %v514
        %v771 = vunpack.c.l.b16 %v515
        %v772 = vunpack.c.l.b16 %v516
        %v773 = vunpack.c.l.b16 %v517
        %v774 = vunpack.c.l.b16 %v518
        %v775 = vunpack.c.l.b16 %v519
        %v776 = vunpack.c.l.b16 %v520
        %v777 = vunpack.c.l.b16 %v521
        %v778 = vunpack.c.l.b16 %v522
        %v779 = vunpack.c.l.b16 %v523
        %v780 = vunpack.c.l.b16 %v524
        %v781 = vunpack.c.l.b16 %v525
        %v782 = vunpack.c.l.b16 %v526
        %v783 = vunpack.c.l.b16 %v527
        %v784 = vunpack.c.l.b16 %v528
        %v785 = vunpack.c.l.b16 %v529
        %v786 = vunpack.c.l.b16 %v530
        %v787 = vunpack.c.l.b16 %v531
        %v788 = vunpack.c.l.b16 %v532
        %v789 = vunpack.c.l.b16 %v533
        %v790 = vunpack.c.l.b16 %v534
        %v791 = vunpack.c.l.b16 %v535
        %v792 = vunpack.c.l.b16 %v536
        %v793 = vunpack.c.l.b16 %v537
        %v794 = vunpack.c.l.b16 %v538
        %v795 = vunpack.c.l.b16 %v539
        %v796 = vunpack.c.l.b16 %v540
        %v797 = vunpack.c.l.b16 %v541
        %v798 = vunpack.c.l.b16 %v542
        %v799 = vunpack.c.l.b16 %v543
        %v800 = vunpack.c.l.b16 %v544
        %v801 = vunpack.c.l.b16 %v545
        %v802 = vunpack.c.l.b16 %v546
        %v803 = vunpack.c.l.b16 %v547
        %v804 = vunpack.c.l.b16 %v548
        %v805 = vunpack.c.l.b16 %v549
        %v806 = vunpack.c.l.b16 %v550
        %v807 = vunpack.c.l.b16 %v551
        %v808 = vunpack.c.l.b16 %v552
        %v809 = vunpack.c.l.b16 %v553
        %v810 = vunpack.c.l.b16 %v554
        %v811 = vunpack.c.l.b16 %v555
        %v812 = vunpack.c.l.b16 %v556
        %v813 = vunpack.c.l.b16 %v557
        %v814 = vunpack.c.l.b16 %v558
        %v815 = vunpack.c.l.b16 %v559
        %v816 = vunpack.c.l.b16 %v560
        %v817 = vunpack.c.l.b16 %v561
        %v818 = vunpack.c.l.b16 %v562
        %v819 = vunpack.c.l.b16 %v563
        %v820 = vunpack.c.l.b16 %v564
        %v821 = vunpack.c.l.b16 %v565
        %v822 = vunpack.c.l.b16 %v566
        %v823 = vunpack.c.l.b16 %v567
        %v824 = vunpack.c.l.b16 %v568
        %v825 = vunpack.c.l.b16 %v569
        %v826 = vunpack.c.l.b16 %v570
        %v827 = vunpack.c.l.b16 %v571
        %v828 = vunpack.c.l.b16 %v572
        %v829 = vunpack.c.l.b16 %v573
        %v830 = vunpack.c.l.b16 %v574
        %v831 = vunpack.c.l.b16 %v575
        %v832 = vunpack.c.l.b16 %v576
        %v833 = vunpack.c.l.b16 %v577
        %v834 = vunpack.c.l.b16 %v578
        %v835 = vunpack.c.l.b16 %v579
        %v836 = vunpack.c.l.b16 %v580
        %v837 = vunpack.c.l.b16 %v581
        %v838 = vunpack.c.l.b16 %v582
        %v839 = vunpack.c.l.b16 %v583
        %v840 = vunpack.c.l.b16 %v584
        %v841 = vunpack.c.l.b16 %v585
        %v842 = vunpack.c.l.b16 %v586
        %v843 = vunpack.c.l.b16 %v587
        %v844 = vunpack.c.l.b16 %v588
        %v845 = vunpack.c.l.b16 %v589
        %v846 = vunpack.c.l.b16 %v590
        %v847 = vunpack.c.l.b16 %v591
        %v848 = vunpack.c.l.b16 %v592
        %v849 = vunpack.c.l.b16 %v593
        %v850 = vunpack.c.l.b16 %v594
        %v851 = vunpack.c.l.b16 %v595
        %v852 = vunpack.c.l.b16 %v596
        %v853 = vunpack.c.l.b16 %v597
        %v854 = vunpack.c.l.b16 %v598
        %v855 = vunpack.c.l.b16 %v599
        %v856 = vunpack.c.l.b16 %v600
        %v857 = vunpack.c.l.b16 %v601
        %v858 = vunpack.c.l.b16 %v602
        %v859 = vunpack.c.l.b16 %v603
        %v860 = vunpack.c.l.b16 %v604
        %v861 = vunpack.c.l.b16 %v605
        %v862 = vunpack.c.l.b16 %v606
        %v863 = vunpack.c.l.b16 %v607
        %v864 = vunpack.c.l.b16 %v608
        %v865 = vunpack.c.l.b16 %v609
        %v866 = vunpack.c.l.b16 %v610
        %v867 = vunpack.c.l.b16 %v611
        %v868 = vunpack.c.l.b16 %v612
        %v869 = vunpack.c.l.b16 %v613
        %v870 = vunpack.c.l.b16 %v614
        %v871 = vunpack.c.l.b16 %v615
        %v872 = vunpack.c.l.b16 %v616
        %v873 = vunpack.c.l.b16 %v617
        %v874 = vunpack.c.l.b16 %v618
        %v875 = vunpack.c.l.b16 %v619
        %v876 = vunpack.c.l.b16 %v620
        %v877 = vunpack.c.l.b16 %v621
        %v878 = vunpack.c.l.b16 %v622
        %v879 = vunpack.c.l.b16 %v623
        %v880 = vpack.c.b16 %v769, %v768
        %v881 = vpack.c.b16 %v771, %v770
        %v882 = vpack.c.b16 %v773, %v772
        %v883 = vpack.c.b16 %v775, %v774
        %v884 = vpack.c.b16 %v777, %v776
        %v885 = vpack.c.b16 %v779, %v778
        %v886 = vpack.c.b16 %v781, %v780
        %v887 = vpack.c.b16 %v783, %v782
        %v888 = vpack.c.b16 %v785, %v784
        %v889 = vpack.c.b16 %v787, %v786
        %v890 = vpack.c.b16 %v789, %v788
        %v891 = vpack.c.b16 %v791, %v790
        %v892 = vpack.c.b16 %v793, %v792
        %v893 = vpack.c.b16 %v795, %v794
        %v894 = vpack.c.b16 %v797, %v796
        %v895 = vpack.c.b16 %v799, %v798
        %v896 = vpack.c.b16 %v801, %v800
        %v897 = vpack.c.b16 %v803, %v802
        %v898 = vpack.c.b16 %v805, %v804
        %v899 = vpack.c.b16 %v807, %v806
        %v900 = vpack.c.b16 %v809, %v808
        %v901 = vpack.c.b16 %v811, %v810
        %v902 = vpack.c.b16 %v813, %v812
        %v903 = vpack.c.b16 %v815, %v814
        %v904 = vpack.c.b16 %v817, %v816
        %v905 = vpack.c.b16 %v819, %v818
        %v906 = vpack.c.b16 %v821, %v820
        %v907 = vpack.c.b16 %v823, %v822
        %v908 = vpack.c.b16 %v825, %v824
        %v909 = vpack.c.b16 %v827, %v826
        %v910 = vpack.c.b16 %v829, %v828
        %v911 = vpack.c.b16 %v831, %v830
        %v912 = vpack.c.b16 %v833, %v832
        %v913 = vpack.c.b16 %v835, %v834
        %v914 = vpack.c.b16 %v837, %v836
        %v915 = vpack.c.b16 %v839, %v838
        %v916 = vpack.c.b16 %v841, %v840
        %v917 = vpack.c.b16 %v843, %v842
        %v918 = vpack.c.b16 %v845, %v844
        %v919 = vpack.c.b16 %v847, %v846
        %v920 = vpack.c.b16 %v849, %v848
        %v921 = vpack.c.b16 %v851, %v850
        %v922 = vpack.c.b16 %v853, %v852
        %v923 = vpack.c.b16 %v855, %v854
        %v924 = vpack.c.b16 %v857, %v856
        %v925 = vpack.c.b16 %v859, %v858
        %v926 = vpack.c.b16 %v861, %v860
        %v927 = vpack.c.b16 %v863, %v862
        %v928 = vpack.c.b16 %v865, %v864
        %v929 = vpack.c.b16 %v867, %v866
        %v930 = vpack.c.b16 %v869, %v868
        %v931 = vpack.c.b16 %v871, %v870
        %v932 = vpack.c.b16 %v873, %v872
        %v933 = vpack.c.b16 %v875, %v874
        %v934 = vpack.c.b16 %v877, %v876
        %v935 = vpack.c.b16 %v879, %v878
        %992 = vmatprep.subr.bf16.mxu0 0
        %993 = vmatpush1.bf16.msra.mxu0 %v887
        %994 = vmatprep.subr.bf16.mxu0 0
        %995 = vmatpush1.bf16.msra.mxu0 %v886
        %996 = vmatprep.subr.bf16.mxu0 0
        %997 = vmatpush1.bf16.msra.mxu0 %v885
        %998 = vmatprep.subr.bf16.mxu0 0
        %999 = vmatpush1.bf16.msra.mxu0 %v884
        %1000 = vmatprep.subr.bf16.mxu0 0
        %1001 = vmatpush1.bf16.msra.mxu0 %v883
        %1002 = vmatprep.subr.bf16.mxu0 0
        %1003 = vmatpush1.bf16.msra.mxu0 %v882
        %1004 = vmatprep.subr.bf16.mxu0 0
        %1005 = vmatpush1.bf16.msra.mxu0 %v881
        %1006 = vmatprep.subr.bf16.mxu0 0
        %1007 = vmatpush1.bf16.msra.mxu0 %v880
        %1008 = vmatprep.subr.bf16.mxu0 0
        %1009 = vmatpush2.bf16.msra.mxu0 %v895
        %1010 = vmatprep.subr.bf16.mxu0 0
        %1011 = vmatpush2.bf16.msra.mxu0 %v894
        %1012 = vmatprep.subr.bf16.mxu0 0
        %1013 = vmatpush2.bf16.msra.mxu0 %v893
        %1014 = vmatprep.subr.bf16.mxu0 0
        %1015 = vmatpush2.bf16.msra.mxu0 %v892
        %1016 = vmatprep.subr.bf16.mxu0 0
        %1017 = vmatpush2.bf16.msra.mxu0 %v891
        %1018 = vmatprep.subr.bf16.mxu0 0
        %1019 = vmatpush2.bf16.msra.mxu0 %v890
        %1020 = vmatprep.subr.bf16.mxu0 0
        %1021 = vmatpush2.bf16.msra.mxu0 %v889
        %1022 = vmatprep.subr.bf16.mxu0 0
        %1023 = vmatpush2.bf16.msra.mxu0 %v888
        %1024 = vmatprep.mubr.bf16.mxu0 %v643
        %1025 = vmatmul.mubr.bf16.gmra.mxu0 %v642
        %v1026 = vpop.f32.mrf.mxu0
        %v1027 = vadd.f32 %v629, %v1026
        %v1028 = vpop.f32.mrf.mxu0
        %v1029 = vpop.f32.mrf.mxu0
        %v1030 = vpop.f32.mrf.mxu0
        %1031 = vdwg.mxu0
        %1032 = vmatprep.subr.bf16.mxu0 0
        %1033 = vmatpush1.bf16.msra.mxu0 %v903
        %1034 = vmatprep.subr.bf16.mxu0 0
        %1035 = vmatpush1.bf16.msra.mxu0 %v902
        %1036 = vmatprep.subr.bf16.mxu0 0
        %1037 = vmatpush1.bf16.msra.mxu0 %v901
        %1038 = vmatprep.subr.bf16.mxu0 0
        %1039 = vmatpush1.bf16.msra.mxu0 %v900
        %1040 = vmatprep.subr.bf16.mxu0 0
        %1041 = vmatpush1.bf16.msra.mxu0 %v899
        %1042 = vmatprep.subr.bf16.mxu0 0
        %1043 = vmatpush1.bf16.msra.mxu0 %v898
        %1044 = vmatprep.subr.bf16.mxu0 0
        %1045 = vmatpush1.bf16.msra.mxu0 %v897
        %1046 = vmatprep.subr.bf16.mxu0 0
        %1047 = vmatpush1.bf16.msra.mxu0 %v896
        %1048 = vmatprep.subr.bf16.mxu0 0
        %1049 = vmatpush2.bf16.msra.mxu0 %v911
        %1050 = vmatprep.subr.bf16.mxu0 0
        %1051 = vmatpush2.bf16.msra.mxu0 %v910
        %1052 = vmatprep.subr.bf16.mxu0 0
        %1053 = vmatpush2.bf16.msra.mxu0 %v909
        %1054 = vmatprep.subr.bf16.mxu0 0
        %1055 = vmatpush2.bf16.msra.mxu0 %v908
        %1056 = vmatprep.subr.bf16.mxu0 0
        %1057 = vmatpush2.bf16.msra.mxu0 %v907
        %1058 = vmatprep.subr.bf16.mxu0 0
        %1059 = vmatpush2.bf16.msra.mxu0 %v906
        %1060 = vmatprep.subr.bf16.mxu0 0
        %1061 = vmatpush2.bf16.msra.mxu0 %v905
        %1062 = vmatprep.subr.bf16.mxu0 0
        %1063 = vmatpush2.bf16.msra.mxu0 %v904
        %1064 = vmatprep.mubr.bf16.mxu0 %v645
        %1065 = vmatmul.mubr.bf16.gmra.mxu0 %v644
        %v1066 = vpop.f32.mrf.mxu0
        %v1067 = vadd.f32 %v1027, %v1066
        %v1068 = vpop.f32.mrf.mxu0
        %v1069 = vpop.f32.mrf.mxu0
        %v1070 = vpop.f32.mrf.mxu0
        %1071 = vdwg.mxu0
        %1072 = vmatprep.subr.bf16.mxu0 0
        %1073 = vmatpush1.bf16.msra.mxu0 %v919
        %1074 = vmatprep.subr.bf16.mxu0 0
        %1075 = vmatpush1.bf16.msra.mxu0 %v918
        %1076 = vmatprep.subr.bf16.mxu0 0
        %1077 = vmatpush1.bf16.msra.mxu0 %v917
        %1078 = vmatprep.subr.bf16.mxu0 0
        %1079 = vmatpush1.bf16.msra.mxu0 %v916
        %1080 = vmatprep.subr.bf16.mxu0 0
        %1081 = vmatpush1.bf16.msra.mxu0 %v915
        %1082 = vmatprep.subr.bf16.mxu0 0
        %1083 = vmatpush1.bf16.msra.mxu0 %v914
        %1084 = vmatprep.subr.bf16.mxu0 0
        %1085 = vmatpush1.bf16.msra.mxu0 %v913
        %1086 = vmatprep.subr.bf16.mxu0 0
        %1087 = vmatpush1.bf16.msra.mxu0 %v912
        %1088 = vmatprep.subr.bf16.mxu0 0
        %1089 = vmatpush2.bf16.msra.mxu0 %v927
        %1090 = vmatprep.subr.bf16.mxu0 0
        %1091 = vmatpush2.bf16.msra.mxu0 %v926
        %1092 = vmatprep.subr.bf16.mxu0 0
        %1093 = vmatpush2.bf16.msra.mxu0 %v925
        %1094 = vmatprep.subr.bf16.mxu0 0
        %1095 = vmatpush2.bf16.msra.mxu0 %v924
        %1096 = vmatprep.subr.bf16.mxu0 0
        %1097 = vmatpush2.bf16.msra.mxu0 %v923
        %1098 = vmatprep.subr.bf16.mxu0 0
        %1099 = vmatpush2.bf16.msra.mxu0 %v922
        %1100 = vmatprep.subr.bf16.mxu0 0
        %1101 = vmatpush2.bf16.msra.mxu0 %v921
        %1102 = vmatprep.subr.bf16.mxu0 0
        %1103 = vmatpush2.bf16.msra.mxu0 %v920
        %1104 = vmatprep.mubr.bf16.mxu0 %v647
        %1105 = vmatmul.mubr.bf16.gmra.mxu0 %v646
        %v1106 = vpop.f32.mrf.mxu0
        %v1107 = vadd.f32 %v1067, %v1106
        %v1108 = vpop.f32.mrf.mxu0
        %v1109 = vpop.f32.mrf.mxu0
        %v1110 = vpop.f32.mrf.mxu0
        %1111 = vdwg.mxu0
        %1112 = vmatprep.subr.bf16.mxu0 0
        %1113 = vmatpush1.bf16.msra.mxu0 %v935
        %1114 = vmatprep.subr.bf16.mxu0 0
        %1115 = vmatpush1.bf16.msra.mxu0 %v934
        %1116 = vmatprep.subr.bf16.mxu0 0
        %1117 = vmatpush1.bf16.msra.mxu0 %v933
        %1118 = vmatprep.subr.bf16.mxu0 0
        %1119 = vmatpush1.bf16.msra.mxu0 %v932
        %1120 = vmatprep.subr.bf16.mxu0 0
        %1121 = vmatpush1.bf16.msra.mxu0 %v931
        %1122 = vmatprep.subr.bf16.mxu0 0
        %1123 = vmatpush1.bf16.msra.mxu0 %v930
        %1124 = vmatprep.subr.bf16.mxu0 0
        %1125 = vmatpush1.bf16.msra.mxu0 %v929
        %1126 = vmatprep.subr.bf16.mxu0 0
        %1127 = vmatpush1.bf16.msra.mxu0 %v928
        %1128 = vmatprep.subr.bf16.mxu0 0
        %1129 = vmatpush2.bf16.msra.mxu0 0
        %1130 = vmatprep.subr.bf16.mxu0 0
        %1131 = vmatpush2.bf16.msra.mxu0 0
        %1132 = vmatprep.subr.bf16.mxu0 0
        %1133 = vmatpush2.bf16.msra.mxu0 0
        %1134 = vmatprep.subr.bf16.mxu0 0
        %1135 = vmatpush2.bf16.msra.mxu0 0
        %1136 = vmatprep.subr.bf16.mxu0 0
        %1137 = vmatpush2.bf16.msra.mxu0 0
        %1138 = vmatprep.subr.bf16.mxu0 0
        %1139 = vmatpush2.bf16.msra.mxu0 0
        %1140 = vmatprep.subr.bf16.mxu0 0
        %1141 = vmatpush2.bf16.msra.mxu0 0
        %1142 = vmatprep.subr.bf16.mxu0 0
        %1143 = vmatpush2.bf16.msra.mxu0 0
        %1144 = vmatprep.mubr.bf16.mxu0 0
        %1145 = vmatmul.mubr.bf16.gmra.mxu0 %v648
        %v1146 = vpop.f32.mrf.mxu0
        %v1147 = vadd.f32 %v1107, %v1146
        %v1148 = vpop.f32.mrf.mxu0
        %v1149 = vpop.f32.mrf.mxu0
        %v1150 = vpop.f32.mrf.mxu0
        %1151 = vdwg.mxu0
        %v1152 = vmax.f32 %v1147, 0.0
        %v1153 = vpack.c.bf16 %v1152, %v1152
        %v1154 = vld [vmem:[%s3] sm:$0xf]
        %v1155 = vld [vmem:[%s3 + $0x4] sm:$0xf]
        %v1156 = vld [vmem:[%s3 + $0x8] sm:$0xf]
        %v1157 = vld [vmem:[%s3 + $0xc] sm:$0xf]
        %v1158 = vld [vmem:[%s3 + $0x10] sm:$0xf]
        %v1159 = vld [vmem:[%s3 + $0x14] sm:$0xf]
        %v1160 = vld [vmem:[%s3 + $0x18] sm:$0xf]
        %v1161 = vld [vmem:[%s3 + $0x1c] sm:$0xf]
        %v1162 = vld [vmem:[%s3 + $0x20] sm:$0xf]
        %v1163 = vld [vmem:[%s3 + $0x24] sm:$0xf]
        %v1164 = vld [vmem:[%s3 + $0x28] sm:$0xf]
        %v1165 = vld [vmem:[%s3 + $0x2c] sm:$0xf]
        %v1166 = vld [vmem:[%s3 + $0x30] sm:$0xf]
        %v1167 = vld [vmem:[%s3 + $0x34] sm:$0xf]
        %v1168 = vld [vmem:[%s3 + $0x38] sm:$0xf]
        %v1169 = vld [vmem:[%s3 + $0x3c] sm:$0xf]
        %v1170 = vld [vmem:[%s4] sm:$0x1]
        %v1172 = vlaneseq
        %v1173 = vshrl.u32 %v1172, 7
        %v1174 = vsub.s32 0, %v1173
        %v1175 = vrot.slane %v1170, %v1174
        %v1193 = vunpack.c.l.b16 %v1154
        %v1194 = vunpack.c.l.b16 %v1155
        %v1195 = vunpack.c.l.b16 %v1156
        %v1196 = vunpack.c.l.b16 %v1157
        %v1197 = vunpack.c.l.b16 %v1158
        %v1198 = vunpack.c.l.b16 %v1159
        %v1199 = vunpack.c.l.b16 %v1160
        %v1200 = vunpack.c.l.b16 %v1161
        %v1201 = vunpack.c.l.b16 %v1162
        %v1202 = vunpack.c.l.b16 %v1163
        %v1203 = vunpack.c.l.b16 %v1164
        %v1204 = vunpack.c.l.b16 %v1165
        %v1205 = vunpack.c.l.b16 %v1166
        %v1206 = vunpack.c.l.b16 %v1167
        %v1207 = vunpack.c.l.b16 %v1168
        %v1208 = vunpack.c.l.b16 %v1169
        %v1209 = vpack.c.b16 %v1194, %v1193
        %v1210 = vpack.c.b16 %v1196, %v1195
        %v1211 = vpack.c.b16 %v1198, %v1197
        %v1212 = vpack.c.b16 %v1200, %v1199
        %v1213 = vpack.c.b16 %v1202, %v1201
        %v1214 = vpack.c.b16 %v1204, %v1203
        %v1215 = vpack.c.b16 %v1206, %v1205
        %v1216 = vpack.c.b16 %v1208, %v1207
        %1225 = vmatprep.subr.bf16.mxu0 0
        %1226 = vmatpush1.bf16.msra.mxu0 %v1216
        %1227 = vmatprep.subr.bf16.mxu0 0
        %1228 = vmatpush1.bf16.msra.mxu0 %v1215
        %1229 = vmatprep.subr.bf16.mxu0 0
        %1230 = vmatpush1.bf16.msra.mxu0 %v1214
        %1231 = vmatprep.subr.bf16.mxu0 0
        %1232 = vmatpush1.bf16.msra.mxu0 %v1213
        %1233 = vmatprep.subr.bf16.mxu0 0
        %1234 = vmatpush1.bf16.msra.mxu0 %v1212
        %1235 = vmatprep.subr.bf16.mxu0 0
        %1236 = vmatpush1.bf16.msra.mxu0 %v1211
        %1237 = vmatprep.subr.bf16.mxu0 0
        %1238 = vmatpush1.bf16.msra.mxu0 %v1210
        %1239 = vmatprep.subr.bf16.mxu0 0
        %1240 = vmatpush1.bf16.msra.mxu0 %v1209
        %1241 = vmatprep.subr.bf16.mxu0 0
        %1242 = vmatpush2.bf16.msra.mxu0 0
        %1243 = vmatprep.subr.bf16.mxu0 0
        %1244 = vmatpush2.bf16.msra.mxu0 0
        %1245 = vmatprep.subr.bf16.mxu0 0
        %1246 = vmatpush2.bf16.msra.mxu0 0
        %1247 = vmatprep.subr.bf16.mxu0 0
        %1248 = vmatpush2.bf16.msra.mxu0 0
        %1249 = vmatprep.subr.bf16.mxu0 0
        %1250 = vmatpush2.bf16.msra.mxu0 0
        %1251 = vmatprep.subr.bf16.mxu0 0
        %1252 = vmatpush2.bf16.msra.mxu0 0
        %1253 = vmatprep.subr.bf16.mxu0 0
        %1254 = vmatpush2.bf16.msra.mxu0 0
        %1255 = vmatprep.subr.bf16.mxu0 0
        %1256 = vmatpush2.bf16.msra.mxu0 0
        %1257 = vmatprep.mubr.bf16.mxu0 0
        %1258 = vmatmul.mubr.bf16.gmra.mxu0 %v1153
        %v1259 = vpop.f32.mrf.mxu0
        %v1260 = vadd.f32 %v1175, %v1259
        %v1261 = vpop.f32.mrf.mxu0
        %v1262 = vpop.f32.mrf.mxu0
        %v1263 = vpop.f32.mrf.mxu0
        %1264 = vdwg.mxu0
        %v1265 = vmax.f32 %v1260, 0.0
        %v1266 = vpack.c.bf16 %v1265, %v1265
        %v1267 = vld [vmem:[%s5] sm:$0xf]
        %v1268 = vld [vmem:[%s5 + $0x4] sm:$0xf]
        %v1269 = vld [vmem:[%s5 + $0x8] sm:$0xf]
        %v1270 = vld [vmem:[%s5 + $0xc] sm:$0xf]
        %v1271 = vld [vmem:[%s5 + $0x10] sm:$0xf]
        %v1272 = vld [vmem:[%s5 + $0x14] sm:$0xf]
        %v1273 = vld [vmem:[%s5 + $0x18] sm:$0xf]
        %v1274 = vld [vmem:[%s5 + $0x1c] sm:$0xf]
        %v1275 = vld [vmem:[%s6] sm:$0x1]
        %v1277 = vlaneseq
        %v1278 = vshrl.u32 %v1277, 7
        %v1279 = vsub.s32 0, %v1278
        %v1280 = vrot.slane %v1275, %v1279
        %v1290 = vunpack.c.l.b16 %v1267
        %v1291 = vunpack.c.l.b16 %v1268
        %v1292 = vunpack.c.l.b16 %v1269
        %v1293 = vunpack.c.l.b16 %v1270
        %v1294 = vunpack.c.l.b16 %v1271
        %v1295 = vunpack.c.l.b16 %v1272
        %v1296 = vunpack.c.l.b16 %v1273
        %v1297 = vunpack.c.l.b16 %v1274
        %v1298 = vpack.c.b16 %v1291, %v1290
        %v1299 = vpack.c.b16 %v1293, %v1292
        %v1300 = vpack.c.b16 %v1295, %v1294
        %v1301 = vpack.c.b16 %v1297, %v1296
        %vm1306 = vcmask 523264
        %v1308 = vsel %vm1306, %v1266, 0
        %1310 = vmatprep.subr.bf16.mxu0 0
        %1311 = vmatpush1.bf16.msra.mxu0 0
        %1312 = vmatprep.subr.bf16.mxu0 0
        %1313 = vmatpush1.bf16.msra.mxu0 0
        %1314 = vmatprep.subr.bf16.mxu0 0
        %1315 = vmatpush1.bf16.msra.mxu0 0
        %1316 = vmatprep.subr.bf16.mxu0 0
        %1317 = vmatpush1.bf16.msra.mxu0 0
        %1318 = vmatprep.subr.bf16.mxu0 0
        %1319 = vmatpush1.bf16.msra.mxu0 %v1301
        %1320 = vmatprep.subr.bf16.mxu0 0
        %1321 = vmatpush1.bf16.msra.mxu0 %v1300
        %1322 = vmatprep.subr.bf16.mxu0 0
        %1323 = vmatpush1.bf16.msra.mxu0 %v1299
        %1324 = vmatprep.subr.bf16.mxu0 0
        %1325 = vmatpush1.bf16.msra.mxu0 %v1298
        %1326 = vmatprep.subr.bf16.mxu0 0
        %1327 = vmatpush2.bf16.msra.mxu0 0
        %1328 = vmatprep.subr.bf16.mxu0 0
        %1329 = vmatpush2.bf16.msra.mxu0 0
        %1330 = vmatprep.subr.bf16.mxu0 0
        %1331 = vmatpush2.bf16.msra.mxu0 0
        %1332 = vmatprep.subr.bf16.mxu0 0
        %1333 = vmatpush2.bf16.msra.mxu0 0
        %1334 = vmatprep.subr.bf16.mxu0 0
        %1335 = vmatpush2.bf16.msra.mxu0 0
        %1336 = vmatprep.subr.bf16.mxu0 0
        %1337 = vmatpush2.bf16.msra.mxu0 0
        %1338 = vmatprep.subr.bf16.mxu0 0
        %1339 = vmatpush2.bf16.msra.mxu0 0
        %1340 = vmatprep.subr.bf16.mxu0 0
        %1341 = vmatpush2.bf16.msra.mxu0 0
        %1342 = vmatprep.mubr.bf16.mxu0 0
        %1343 = vmatmul.mubr.bf16.gmra.mxu0 %v1308
        %v1344 = vpop.f32.mrf.mxu0
        %v1345 = vadd.f32 %v1280, %v1344
        %v1346 = vpop.f32.mrf.mxu0
        %v1347 = vpop.f32.mrf.mxu0
        %v1348 = vpop.f32.mrf.mxu0
        %1349 = vdwg.mxu0
        %v1350 = vpack.c.bf16 %v1345, %v1345
        %v1351 = vld [vmem:[%s7] sm:$0xf]
        %v1352 = vld [vmem:[%s7 + $0x4] sm:$0xf]
        %v1353 = vld [vmem:[%s7 + $0x8] sm:$0xf]
        %v1354 = vld [vmem:[%s7 + $0xc] sm:$0xf]
        %v1355 = vld [vmem:[%s7 + $0x10] sm:$0xf]
        %v1356 = vld [vmem:[%s7 + $0x14] sm:$0xf]
        %v1357 = vld [vmem:[%s7 + $0x18] sm:$0xf]
        %v1358 = vld [vmem:[%s7 + $0x1c] sm:$0xf]
        %v1359 = vld [vmem:[%s7 + $0x20] sm:$0xf]
        %v1360 = vld [vmem:[%s7 + $0x24] sm:$0xf]
        %v1361 = vld [vmem:[%s7 + $0x28] sm:$0xf]
        %v1362 = vld [vmem:[%s7 + $0x2c] sm:$0xf]
        %v1363 = vld [vmem:[%s7 + $0x30] sm:$0xf]
        %v1364 = vld [vmem:[%s7 + $0x34] sm:$0xf]
        %v1365 = vld [vmem:[%s7 + $0x38] sm:$0xf]
        %v1366 = vld [vmem:[%s7 + $0x3c] sm:$0xf]
        %v1367 = vld [vmem:[%s8] sm:$0x1]
        %v1369 = vlaneseq
        %v1370 = vshrl.u32 %v1369, 7
        %v1371 = vsub.s32 0, %v1370
        %v1372 = vrot.slane %v1367, %v1371
        %v1390 = vunpack.c.l.b16 %v1351
        %v1391 = vunpack.c.l.b16 %v1352
        %v1392 = vunpack.c.l.b16 %v1353
        %v1393 = vunpack.c.l.b16 %v1354
        %v1394 = vunpack.c.l.b16 %v1355
        %v1395 = vunpack.c.l.b16 %v1356
        %v1396 = vunpack.c.l.b16 %v1357
        %v1397 = vunpack.c.l.b16 %v1358
        %v1398 = vunpack.c.l.b16 %v1359
        %v1399 = vunpack.c.l.b16 %v1360
        %v1400 = vunpack.c.l.b16 %v1361
        %v1401 = vunpack.c.l.b16 %v1362
        %v1402 = vunpack.c.l.b16 %v1363
        %v1403 = vunpack.c.l.b16 %v1364
        %v1404 = vunpack.c.l.b16 %v1365
        %v1405 = vunpack.c.l.b16 %v1366
        %v1406 = vpack.c.b16 %v1391, %v1390
        %v1407 = vpack.c.b16 %v1393, %v1392
        %v1408 = vpack.c.b16 %v1395, %v1394
        %v1409 = vpack.c.b16 %v1397, %v1396
        %v1410 = vpack.c.b16 %v1399, %v1398
        %v1411 = vpack.c.b16 %v1401, %v1400
        %v1412 = vpack.c.b16 %v1403, %v1402
        %v1413 = vpack.c.b16 %v1405, %v1404
        %1422 = vmatprep.subr.bf16.mxu0 0
        %1423 = vmatpush1.bf16.msra.mxu0 %v1413
        %1424 = vmatprep.subr.bf16.mxu0 0
        %1425 = vmatpush1.bf16.msra.mxu0 %v1412
        %1426 = vmatprep.subr.bf16.mxu0 0
        %1427 = vmatpush1.bf16.msra.mxu0 %v1411
        %1428 = vmatprep.subr.bf16.mxu0 0
        %1429 = vmatpush1.bf16.msra.mxu0 %v1410
        %1430 = vmatprep.subr.bf16.mxu0 0
        %1431 = vmatpush1.bf16.msra.mxu0 %v1409
        %1432 = vmatprep.subr.bf16.mxu0 0
        %1433 = vmatpush1.bf16.msra.mxu0 %v1408
        %1434 = vmatprep.subr.bf16.mxu0 0
        %1435 = vmatpush1.bf16.msra.mxu0 %v1407
        %1436 = vmatprep.subr.bf16.mxu0 0
        %1437 = vmatpush1.bf16.msra.mxu0 %v1406
        %1438 = vmatprep.subr.bf16.mxu0 0
        %1439 = vmatpush2.bf16.msra.mxu0 0
        %1440 = vmatprep.subr.bf16.mxu0 0
        %1441 = vmatpush2.bf16.msra.mxu0 0
        %1442 = vmatprep.subr.bf16.mxu0 0
        %1443 = vmatpush2.bf16.msra.mxu0 0
        %1444 = vmatprep.subr.bf16.mxu0 0
        %1445 = vmatpush2.bf16.msra.mxu0 0
        %1446 = vmatprep.subr.bf16.mxu0 0
        %1447 = vmatpush2.bf16.msra.mxu0 0
        %1448 = vmatprep.subr.bf16.mxu0 0
        %1449 = vmatpush2.bf16.msra.mxu0 0
        %1450 = vmatprep.subr.bf16.mxu0 0
        %1451 = vmatpush2.bf16.msra.mxu0 0
        %1452 = vmatprep.subr.bf16.mxu0 0
        %1453 = vmatpush2.bf16.msra.mxu0 0
        %1454 = vmatprep.mubr.bf16.mxu0 0
        %1455 = vmatmul.mubr.bf16.gmra.mxu0 %v1350
        %v1456 = vpop.f32.mrf.mxu0
        %v1457 = vadd.f32 %v1372, %v1456
        %v1458 = vpop.f32.mrf.mxu0
        %v1459 = vpop.f32.mrf.mxu0
        %v1460 = vpop.f32.mrf.mxu0
        %1461 = vdwg.mxu0
        %v1462 = vmax.f32 %v1457, 0.0
        %v1463 = vpack.c.bf16 %v1462, %v1462
        %v1464 = vld [vmem:[%s9] sm:$0xf]
        %v1465 = vld [vmem:[%s9 + $0x4] sm:$0xf]
        %v1466 = vld [vmem:[%s9 + $0x8] sm:$0xf]
        %v1467 = vld [vmem:[%s9 + $0xc] sm:$0xf]
        %v1468 = vld [vmem:[%s9 + $0x10] sm:$0xf]
        %v1469 = vld [vmem:[%s9 + $0x14] sm:$0xf]
        %v1470 = vld [vmem:[%s9 + $0x18] sm:$0xf]
        %v1471 = vld [vmem:[%s9 + $0x1c] sm:$0xf]
        %v1472 = vld [vmem:[%s10] sm:$0x1]
        %v1474 = vlaneseq
        %v1475 = vshrl.u32 %v1474, 7
        %v1476 = vsub.s32 0, %v1475
        %v1477 = vrot.slane %v1472, %v1476
        %v1487 = vunpack.c.l.b16 %v1464
        %v1488 = vunpack.c.l.b16 %v1465
        %v1489 = vunpack.c.l.b16 %v1466
        %v1490 = vunpack.c.l.b16 %v1467
        %v1491 = vunpack.c.l.b16 %v1468
        %v1492 = vunpack.c.l.b16 %v1469
        %v1493 = vunpack.c.l.b16 %v1470
        %v1494 = vunpack.c.l.b16 %v1471
        %v1495 = vpack.c.b16 %v1488, %v1487
        %v1496 = vpack.c.b16 %v1490, %v1489
        %v1497 = vpack.c.b16 %v1492, %v1491
        %v1498 = vpack.c.b16 %v1494, %v1493
        %v1504 = vsel %vm1306, %v1463, 0
        %1506 = vmatprep.subr.bf16.mxu0 0
        %1507 = vmatpush1.bf16.msra.mxu0 0
        %1508 = vmatprep.subr.bf16.mxu0 0
        %1509 = vmatpush1.bf16.msra.mxu0 0
        %1510 = vmatprep.subr.bf16.mxu0 0
        %1511 = vmatpush1.bf16.msra.mxu0 0
        %1512 = vmatprep.subr.bf16.mxu0 0
        %1513 = vmatpush1.bf16.msra.mxu0 0
        %1514 = vmatprep.subr.bf16.mxu0 0
        %1515 = vmatpush1.bf16.msra.mxu0 %v1498
        %1516 = vmatprep.subr.bf16.mxu0 0
        %1517 = vmatpush1.bf16.msra.mxu0 %v1497
        %1518 = vmatprep.subr.bf16.mxu0 0
        %1519 = vmatpush1.bf16.msra.mxu0 %v1496
        %1520 = vmatprep.subr.bf16.mxu0 0
        %1521 = vmatpush1.bf16.msra.mxu0 %v1495
        %1522 = vmatprep.subr.bf16.mxu0 0
        %1523 = vmatpush2.bf16.msra.mxu0 0
        %1524 = vmatprep.subr.bf16.mxu0 0
        %1525 = vmatpush2.bf16.msra.mxu0 0
        %1526 = vmatprep.subr.bf16.mxu0 0
        %1527 = vmatpush2.bf16.msra.mxu0 0
        %1528 = vmatprep.subr.bf16.mxu0 0
        %1529 = vmatpush2.bf16.msra.mxu0 0
        %1530 = vmatprep.subr.bf16.mxu0 0
        %1531 = vmatpush2.bf16.msra.mxu0 0
        %1532 = vmatprep.subr.bf16.mxu0 0
        %1533 = vmatpush2.bf16.msra.mxu0 0
        %1534 = vmatprep.subr.bf16.mxu0 0
        %1535 = vmatpush2.bf16.msra.mxu0 0
        %1536 = vmatprep.subr.bf16.mxu0 0
        %1537 = vmatpush2.bf16.msra.mxu0 0
        %1538 = vmatprep.mubr.bf16.mxu0 0
        %1539 = vmatmul.mubr.bf16.gmra.mxu0 %v1504
        %v1540 = vpop.f32.mrf.mxu0
        %v1541 = vadd.f32 %v1477, %v1540
        %v1542 = vpop.f32.mrf.mxu0
        %v1543 = vpop.f32.mrf.mxu0
        %v1544 = vpop.f32.mrf.mxu0
        %1545 = vdwg.mxu0
        %v1546 = vmax.f32 %v1541, 0.0
        %v1547 = vpack.c.bf16 %v1546, %v1546
        %v1548 = vld [vmem:[#allocation5] sm:$0xff]
        %v1549 = vld [vmem:[#allocation5 + $0x8] sm:$0xff]
        %v1550 = vld [vmem:[#allocation5 + $0x10] sm:$0xff]
        %v1551 = vld [vmem:[#allocation5 + $0x18] sm:$0xf]
        %v1552 = vld [vmem:[#allocation5 + $0x1c] sm:$0xff]
        %v1553 = vld [vmem:[#allocation5 + $0x24] sm:$0xff]
        %v1554 = vld [vmem:[#allocation5 + $0x2c] sm:$0xff]
        %v1555 = vld [vmem:[#allocation5 + $0x34] sm:$0xf]
        %v1556 = vld [vmem:[#allocation5 + $0x38] sm:$0xff]
        %v1557 = vld [vmem:[#allocation5 + $0x40] sm:$0xff]
        %v1558 = vld [vmem:[#allocation5 + $0x48] sm:$0xff]
        %v1559 = vld [vmem:[#allocation5 + $0x50] sm:$0xf]
        %v1560 = vld [vmem:[#allocation5 + $0x54] sm:$0xff]
        %v1561 = vld [vmem:[#allocation5 + $0x5c] sm:$0xff]
        %v1562 = vld [vmem:[#allocation5 + $0x64] sm:$0xff]
        %v1563 = vld [vmem:[#allocation5 + $0x6c] sm:$0xf]
        %v1564 = vld [vmem:[#allocation5 + $0x70] sm:$0xff]
        %v1565 = vld [vmem:[#allocation5 + $0x78] sm:$0xff]
        %v1566 = vld [vmem:[#allocation5 + $0x80] sm:$0xff]
        %v1567 = vld [vmem:[#allocation5 + $0x88] sm:$0xf]
        %v1568 = vld [vmem:[#allocation5 + $0x8c] sm:$0xff]
        %v1569 = vld [vmem:[#allocation5 + $0x94] sm:$0xff]
        %v1570 = vld [vmem:[#allocation5 + $0x9c] sm:$0xff]
        %v1571 = vld [vmem:[#allocation5 + $0xa4] sm:$0xf]
        %v1572 = vld [vmem:[#allocation5 + $0xa8] sm:$0xff]
        %v1573 = vld [vmem:[#allocation5 + $0xb0] sm:$0xff]
        %v1574 = vld [vmem:[#allocation5 + $0xb8] sm:$0xff]
        %v1575 = vld [vmem:[#allocation5 + $0xc0] sm:$0xf]
        %v1576 = vld [vmem:[#allocation5 + $0xc4] sm:$0xff]
        %v1577 = vld [vmem:[#allocation5 + $0xcc] sm:$0xff]
        %v1578 = vld [vmem:[#allocation5 + $0xd4] sm:$0xff]
        %v1579 = vld [vmem:[#allocation5 + $0xdc] sm:$0xf]
        %v1580 = vld [vmem:[#allocation5 + $0xe0] sm:$0xff]
        %v1581 = vld [vmem:[#allocation5 + $0xe8] sm:$0xff]
        %v1582 = vld [vmem:[#allocation5 + $0xf0] sm:$0xff]
        %v1583 = vld [vmem:[#allocation5 + $0xf8] sm:$0xf]
        %v1584 = vld [vmem:[#allocation5 + $0xfc] sm:$0xff]
        %v1585 = vld [vmem:[#allocation5 + $0x104] sm:$0xff]
        %v1586 = vld [vmem:[#allocation5 + $0x10c] sm:$0xff]
        %v1587 = vld [vmem:[#allocation5 + $0x114] sm:$0xf]
        %v1588 = vld [vmem:[#allocation5 + $0x118] sm:$0xff]
        %v1589 = vld [vmem:[#allocation5 + $0x120] sm:$0xff]
        %v1590 = vld [vmem:[#allocation5 + $0x128] sm:$0xff]
        %v1591 = vld [vmem:[#allocation5 + $0x130] sm:$0xf]
        %v1592 = vld [vmem:[#allocation5 + $0x134] sm:$0xff]
        %v1593 = vld [vmem:[#allocation5 + $0x13c] sm:$0xff]
        %v1594 = vld [vmem:[#allocation5 + $0x144] sm:$0xff]
        %v1595 = vld [vmem:[#allocation5 + $0x14c] sm:$0xf]
        %v1596 = vld [vmem:[#allocation5 + $0x150] sm:$0xff]
        %v1597 = vld [vmem:[#allocation5 + $0x158] sm:$0xff]
        %v1598 = vld [vmem:[#allocation5 + $0x160] sm:$0xff]
        %v1599 = vld [vmem:[#allocation5 + $0x168] sm:$0xf]
        %v1600 = vld [vmem:[#allocation5 + $0x16c] sm:$0xff]
        %v1601 = vld [vmem:[#allocation5 + $0x174] sm:$0xff]
        %v1602 = vld [vmem:[#allocation5 + $0x17c] sm:$0xff]
        %v1603 = vld [vmem:[#allocation5 + $0x184] sm:$0xf]
        %v1604 = vld [vmem:[#allocation5 + $0x188] sm:$0xff]
        %v1605 = vld [vmem:[#allocation5 + $0x190] sm:$0xff]
        %v1606 = vld [vmem:[#allocation5 + $0x198] sm:$0xff]
        %v1607 = vld [vmem:[#allocation5 + $0x1a0] sm:$0xf]
        %v1608 = vld [vmem:[#allocation5 + $0x1a4] sm:$0xff]
        %v1609 = vld [vmem:[#allocation5 + $0x1ac] sm:$0xff]
        %v1610 = vld [vmem:[#allocation5 + $0x1b4] sm:$0xff]
        %v1611 = vld [vmem:[#allocation5 + $0x1bc] sm:$0xf]
        %v1612 = vld [vmem:[%s12] sm:$0xff]
        %v1614 = vlaneseq
        %v1615 = vshrl.u32 %v1614, 7
        %v1616 = vsub.s32 0, %v1615
        %v1617 = vrot.slane %v1612, %v1616
        %v1618 = vlaneseq
        %v1619 = vshrl.u32 %v1618, 7
        %v1620 = vsub.s32 1, %v1619
        %v1621 = vrot.slane %v1612, %v1620
        %v1622 = vlaneseq
        %v1623 = vshrl.u32 %v1622, 7
        %v1624 = vsub.s32 2, %v1623
        %v1625 = vrot.slane %v1612, %v1624
        %v1626 = vlaneseq
        %v1627 = vshrl.u32 %v1626, 7
        %v1628 = vsub.s32 3, %v1627
        %v1629 = vrot.slane %v1612, %v1628
        %v1630 = vlaneseq
        %v1631 = vshrl.u32 %v1630, 7
        %v1632 = vsub.s32 4, %v1631
        %v1633 = vrot.slane %v1612, %v1632
        %v1634 = vlaneseq
        %v1635 = vshrl.u32 %v1634, 7
        %v1636 = vsub.s32 5, %v1635
        %v1637 = vrot.slane %v1612, %v1636
        %v1638 = vlaneseq
        %v1639 = vshrl.u32 %v1638, 7
        %v1640 = vsub.s32 6, %v1639
        %v1641 = vrot.slane %v1612, %v1640
        %v1713 = vunpack.c.l.b16 %v1548
        %v1714 = vunpack.c.h.b16 %v1548
        %v1715 = vunpack.c.l.b16 %v1549
        %v1716 = vunpack.c.h.b16 %v1549
        %v1717 = vunpack.c.l.b16 %v1550
        %v1718 = vunpack.c.h.b16 %v1550
        %v1719 = vunpack.c.l.b16 %v1551
        %v1720 = vunpack.c.l.b16 %v1552
        %v1721 = vunpack.c.h.b16 %v1552
        %v1722 = vunpack.c.l.b16 %v1553
        %v1723 = vunpack.c.h.b16 %v1553
        %v1724 = vunpack.c.l.b16 %v1554
        %v1725 = vunpack.c.h.b16 %v1554
        %v1726 = vunpack.c.l.b16 %v1555
        %v1727 = vunpack.c.l.b16 %v1556
        %v1728 = vunpack.c.h.b16 %v1556
        %v1729 = vunpack.c.l.b16 %v1557
        %v1730 = vunpack.c.h.b16 %v1557
        %v1731 = vunpack.c.l.b16 %v1558
        %v1732 = vunpack.c.h.b16 %v1558
        %v1733 = vunpack.c.l.b16 %v1559
        %v1734 = vunpack.c.l.b16 %v1560
        %v1735 = vunpack.c.h.b16 %v1560
        %v1736 = vunpack.c.l.b16 %v1561
        %v1737 = vunpack.c.h.b16 %v1561
        %v1738 = vunpack.c.l.b16 %v1562
        %v1739 = vunpack.c.h.b16 %v1562
        %v1740 = vunpack.c.l.b16 %v1563
        %v1741 = vunpack.c.l.b16 %v1564
        %v1742 = vunpack.c.h.b16 %v1564
        %v1743 = vunpack.c.l.b16 %v1565
        %v1744 = vunpack.c.h.b16 %v1565
        %v1745 = vunpack.c.l.b16 %v1566
        %v1746 = vunpack.c.h.b16 %v1566
        %v1747 = vunpack.c.l.b16 %v1567
        %v1748 = vunpack.c.l.b16 %v1568
        %v1749 = vunpack.c.h.b16 %v1568
        %v1750 = vunpack.c.l.b16 %v1569
        %v1751 = vunpack.c.h.b16 %v1569
        %v1752 = vunpack.c.l.b16 %v1570
        %v1753 = vunpack.c.h.b16 %v1570
        %v1754 = vunpack.c.l.b16 %v1571
        %v1755 = vunpack.c.l.b16 %v1572
        %v1756 = vunpack.c.h.b16 %v1572
        %v1757 = vunpack.c.l.b16 %v1573
        %v1758 = vunpack.c.h.b16 %v1573
        %v1759 = vunpack.c.l.b16 %v1574
        %v1760 = vunpack.c.h.b16 %v1574
        %v1761 = vunpack.c.l.b16 %v1575
        %v1762 = vunpack.c.l.b16 %v1576
        %v1763 = vunpack.c.h.b16 %v1576
        %v1764 = vunpack.c.l.b16 %v1577
        %v1765 = vunpack.c.h.b16 %v1577
        %v1766 = vunpack.c.l.b16 %v1578
        %v1767 = vunpack.c.h.b16 %v1578
        %v1768 = vunpack.c.l.b16 %v1579
        %v1769 = vunpack.c.l.b16 %v1580
        %v1770 = vunpack.c.h.b16 %v1580
        %v1771 = vunpack.c.l.b16 %v1581
        %v1772 = vunpack.c.h.b16 %v1581
        %v1773 = vunpack.c.l.b16 %v1582
        %v1774 = vunpack.c.h.b16 %v1582
        %v1775 = vunpack.c.l.b16 %v1583
        %v1776 = vunpack.c.l.b16 %v1584
        %v1777 = vunpack.c.h.b16 %v1584
        %v1778 = vunpack.c.l.b16 %v1585
        %v1779 = vunpack.c.h.b16 %v1585
        %v1780 = vunpack.c.l.b16 %v1586
        %v1781 = vunpack.c.h.b16 %v1586
        %v1782 = vunpack.c.l.b16 %v1587
        %v1783 = vunpack.c.l.b16 %v1588
        %v1784 = vunpack.c.h.b16 %v1588
        %v1785 = vunpack.c.l.b16 %v1589
        %v1786 = vunpack.c.h.b16 %v1589
        %v1787 = vunpack.c.l.b16 %v1590
        %v1788 = vunpack.c.h.b16 %v1590
        %v1789 = vunpack.c.l.b16 %v1591
        %v1790 = vunpack.c.l.b16 %v1592
        %v1791 = vunpack.c.h.b16 %v1592
        %v1792 = vunpack.c.l.b16 %v1593
        %v1793 = vunpack.c.h.b16 %v1593
        %v1794 = vunpack.c.l.b16 %v1594
        %v1795 = vunpack.c.h.b16 %v1594
        %v1796 = vunpack.c.l.b16 %v1595
        %v1797 = vunpack.c.l.b16 %v1596
        %v1798 = vunpack.c.h.b16 %v1596
        %v1799 = vunpack.c.l.b16 %v1597
        %v1800 = vunpack.c.h.b16 %v1597
        %v1801 = vunpack.c.l.b16 %v1598
        %v1802 = vunpack.c.h.b16 %v1598
        %v1803 = vunpack.c.l.b16 %v1599
        %v1804 = vunpack.c.l.b16 %v1600
        %v1805 = vunpack.c.h.b16 %v1600
        %v1806 = vunpack.c.l.b16 %v1601
        %v1807 = vunpack.c.h.b16 %v1601
        %v1808 = vunpack.c.l.b16 %v1602
        %v1809 = vunpack.c.h.b16 %v1602
        %v1810 = vunpack.c.l.b16 %v1603
        %v1811 = vunpack.c.l.b16 %v1604
        %v1812 = vunpack.c.h.b16 %v1604
        %v1813 = vunpack.c.l.b16 %v1605
        %v1814 = vunpack.c.h.b16 %v1605
        %v1815 = vunpack.c.l.b16 %v1606
        %v1816 = vunpack.c.h.b16 %v1606
        %v1817 = vunpack.c.l.b16 %v1607
        %v1818 = vunpack.c.l.b16 %v1608
        %v1819 = vunpack.c.h.b16 %v1608
        %v1820 = vunpack.c.l.b16 %v1609
        %v1821 = vunpack.c.h.b16 %v1609
        %v1822 = vunpack.c.l.b16 %v1610
        %v1823 = vunpack.c.h.b16 %v1610
        %v1824 = vunpack.c.l.b16 %v1611
        %v1825 = vpack.c.b16 %v1720, %v1713
        %v1826 = vpack.c.b16 %v1721, %v1714
        %v1827 = vpack.c.b16 %v1722, %v1715
        %v1828 = vpack.c.b16 %v1723, %v1716
        %v1829 = vpack.c.b16 %v1724, %v1717
        %v1830 = vpack.c.b16 %v1725, %v1718
        %v1831 = vpack.c.b16 %v1726, %v1719
        %v1832 = vpack.c.b16 %v1734, %v1727
        %v1833 = vpack.c.b16 %v1735, %v1728
        %v1834 = vpack.c.b16 %v1736, %v1729
        %v1835 = vpack.c.b16 %v1737, %v1730
        %v1836 = vpack.c.b16 %v1738, %v1731
        %v1837 = vpack.c.b16 %v1739, %v1732
        %v1838 = vpack.c.b16 %v1740, %v1733
        %v1839 = vpack.c.b16 %v1748, %v1741
        %v1840 = vpack.c.b16 %v1749, %v1742
        %v1841 = vpack.c.b16 %v1750, %v1743
        %v1842 = vpack.c.b16 %v1751, %v1744
        %v1843 = vpack.c.b16 %v1752, %v1745
        %v1844 = vpack.c.b16 %v1753, %v1746
        %v1845 = vpack.c.b16 %v1754, %v1747
        %v1846 = vpack.c.b16 %v1762, %v1755
        %v1847 = vpack.c.b16 %v1763, %v1756
        %v1848 = vpack.c.b16 %v1764, %v1757
        %v1849 = vpack.c.b16 %v1765, %v1758
        %v1850 = vpack.c.b16 %v1766, %v1759
        %v1851 = vpack.c.b16 %v1767, %v1760
        %v1852 = vpack.c.b16 %v1768, %v1761
        %v1853 = vpack.c.b16 %v1776, %v1769
        %v1854 = vpack.c.b16 %v1777, %v1770
        %v1855 = vpack.c.b16 %v1778, %v1771
        %v1856 = vpack.c.b16 %v1779, %v1772
        %v1857 = vpack.c.b16 %v1780, %v1773
        %v1858 = vpack.c.b16 %v1781, %v1774
        %v1859 = vpack.c.b16 %v1782, %v1775
        %v1860 = vpack.c.b16 %v1790, %v1783
        %v1861 = vpack.c.b16 %v1791, %v1784
        %v1862 = vpack.c.b16 %v1792, %v1785
        %v1863 = vpack.c.b16 %v1793, %v1786
        %v1864 = vpack.c.b16 %v1794, %v1787
        %v1865 = vpack.c.b16 %v1795, %v1788
        %v1866 = vpack.c.b16 %v1796, %v1789
        %v1867 = vpack.c.b16 %v1804, %v1797
        %v1868 = vpack.c.b16 %v1805, %v1798
        %v1869 = vpack.c.b16 %v1806, %v1799
        %v1870 = vpack.c.b16 %v1807, %v1800
        %v1871 = vpack.c.b16 %v1808, %v1801
        %v1872 = vpack.c.b16 %v1809, %v1802
        %v1873 = vpack.c.b16 %v1810, %v1803
        %v1874 = vpack.c.b16 %v1818, %v1811
        %v1875 = vpack.c.b16 %v1819, %v1812
        %v1876 = vpack.c.b16 %v1820, %v1813
        %v1877 = vpack.c.b16 %v1821, %v1814
        %v1878 = vpack.c.b16 %v1822, %v1815
        %v1879 = vpack.c.b16 %v1823, %v1816
        %v1880 = vpack.c.b16 %v1824, %v1817
        %1937 = vmatprep.subr.bf16.mxu0 %v1875
        %1938 = vmatpush1.bf16.msra.mxu0 %v1874
        %1939 = vmatprep.subr.bf16.mxu0 %v1868
        %1940 = vmatpush1.bf16.msra.mxu0 %v1867
        %1941 = vmatprep.subr.bf16.mxu0 %v1861
        %1942 = vmatpush1.bf16.msra.mxu0 %v1860
        %1943 = vmatprep.subr.bf16.mxu0 %v1854
        %1944 = vmatpush1.bf16.msra.mxu0 %v1853
        %1945 = vmatprep.subr.bf16.mxu0 %v1847
        %1946 = vmatpush1.bf16.msra.mxu0 %v1846
        %1947 = vmatprep.subr.bf16.mxu0 %v1840
        %1948 = vmatpush1.bf16.msra.mxu0 %v1839
        %1949 = vmatprep.subr.bf16.mxu0 %v1833
        %1950 = vmatpush1.bf16.msra.mxu0 %v1832
        %1951 = vmatprep.subr.bf16.mxu0 %v1826
        %1952 = vmatpush1.bf16.msra.mxu0 %v1825
        %1953 = vmatprep.subr.bf16.mxu0 0
        %1954 = vmatpush2.bf16.msra.mxu0 0
        %1955 = vmatprep.subr.bf16.mxu0 0
        %1956 = vmatpush2.bf16.msra.mxu0 0
        %1957 = vmatprep.subr.bf16.mxu0 0
        %1958 = vmatpush2.bf16.msra.mxu0 0
        %1959 = vmatprep.subr.bf16.mxu0 0
        %1960 = vmatpush2.bf16.msra.mxu0 0
        %1961 = vmatprep.subr.bf16.mxu0 0
        %1962 = vmatpush2.bf16.msra.mxu0 0
        %1963 = vmatprep.subr.bf16.mxu0 0
        %1964 = vmatpush2.bf16.msra.mxu0 0
        %1965 = vmatprep.subr.bf16.mxu0 0
        %1966 = vmatpush2.bf16.msra.mxu0 0
        %1967 = vmatprep.subr.bf16.mxu0 0
        %1968 = vmatpush2.bf16.msra.mxu0 0
        %1969 = vmatprep.mubr.bf16.mxu0 0
        %1970 = vmatmul.mubr.bf16.gmra.mxu0 %v1547
        %v1971 = vpop.f32.mrf.mxu0
        %v1972 = vadd.f32 %v1617, %v1971
        %v1973 = vpop.f32.mrf.mxu0
        %v1974 = vadd.f32 %v1621, %v1973
        %v1975 = vpop.f32.mrf.mxu0
        %v1976 = vpop.f32.mrf.mxu0
        %1977 = vdwg.mxu0
        %1978 = vmatprep.subr.bf16.mxu0 %v1877
        %1979 = vmatpush1.bf16.msra.mxu0 %v1876
        %1980 = vmatprep.subr.bf16.mxu0 %v1870
        %1981 = vmatpush1.bf16.msra.mxu0 %v1869
        %1982 = vmatprep.subr.bf16.mxu0 %v1863
        %1983 = vmatpush1.bf16.msra.mxu0 %v1862
        %1984 = vmatprep.subr.bf16.mxu0 %v1856
        %1985 = vmatpush1.bf16.msra.mxu0 %v1855
        %1986 = vmatprep.subr.bf16.mxu0 %v1849
        %1987 = vmatpush1.bf16.msra.mxu0 %v1848
        %1988 = vmatprep.subr.bf16.mxu0 %v1842
        %1989 = vmatpush1.bf16.msra.mxu0 %v1841
        %1990 = vmatprep.subr.bf16.mxu0 %v1835
        %1991 = vmatpush1.bf16.msra.mxu0 %v1834
        %1992 = vmatprep.subr.bf16.mxu0 %v1828
        %1993 = vmatpush1.bf16.msra.mxu0 %v1827
        %1994 = vmatprep.subr.bf16.mxu0 0
        %1995 = vmatpush2.bf16.msra.mxu0 0
        %1996 = vmatprep.subr.bf16.mxu0 0
        %1997 = vmatpush2.bf16.msra.mxu0 0
        %1998 = vmatprep.subr.bf16.mxu0 0
        %1999 = vmatpush2.bf16.msra.mxu0 0
        %2000 = vmatprep.subr.bf16.mxu0 0
        %2001 = vmatpush2.bf16.msra.mxu0 0
        %2002 = vmatprep.subr.bf16.mxu0 0
        %2003 = vmatpush2.bf16.msra.mxu0 0
        %2004 = vmatprep.subr.bf16.mxu0 0
        %2005 = vmatpush2.bf16.msra.mxu0 0
        %2006 = vmatprep.subr.bf16.mxu0 0
        %2007 = vmatpush2.bf16.msra.mxu0 0
        %2008 = vmatprep.subr.bf16.mxu0 0
        %2009 = vmatpush2.bf16.msra.mxu0 0
        %2010 = vmatprep.mubr.bf16.mxu0 0
        %2011 = vmatmul.mubr.bf16.gmra.mxu0 %v1547
        %v2012 = vpop.f32.mrf.mxu0
        %v2013 = vadd.f32 %v1625, %v2012
        %v2014 = vpop.f32.mrf.mxu0
        %v2015 = vadd.f32 %v1629, %v2014
        %v2016 = vpop.f32.mrf.mxu0
        %v2017 = vpop.f32.mrf.mxu0
        %2018 = vdwg.mxu0
        %2019 = vmatprep.subr.bf16.mxu0 %v1879
        %2020 = vmatpush1.bf16.msra.mxu0 %v1878
        %2021 = vmatprep.subr.bf16.mxu0 %v1872
        %2022 = vmatpush1.bf16.msra.mxu0 %v1871
        %2023 = vmatprep.subr.bf16.mxu0 %v1865
        %2024 = vmatpush1.bf16.msra.mxu0 %v1864
        %2025 = vmatprep.subr.bf16.mxu0 %v1858
        %2026 = vmatpush1.bf16.msra.mxu0 %v1857
        %2027 = vmatprep.subr.bf16.mxu0 %v1851
        %2028 = vmatpush1.bf16.msra.mxu0 %v1850
        %2029 = vmatprep.subr.bf16.mxu0 %v1844
        %2030 = vmatpush1.bf16.msra.mxu0 %v1843
        %2031 = vmatprep.subr.bf16.mxu0 %v1837
        %2032 = vmatpush1.bf16.msra.mxu0 %v1836
        %2033 = vmatprep.subr.bf16.mxu0 %v1830
        %2034 = vmatpush1.bf16.msra.mxu0 %v1829
        %2035 = vmatprep.subr.bf16.mxu0 0
        %2036 = vmatpush2.bf16.msra.mxu0 0
        %2037 = vmatprep.subr.bf16.mxu0 0
        %2038 = vmatpush2.bf16.msra.mxu0 0
        %2039 = vmatprep.subr.bf16.mxu0 0
        %2040 = vmatpush2.bf16.msra.mxu0 0
        %2041 = vmatprep.subr.bf16.mxu0 0
        %2042 = vmatpush2.bf16.msra.mxu0 0
        %2043 = vmatprep.subr.bf16.mxu0 0
        %2044 = vmatpush2.bf16.msra.mxu0 0
        %2045 = vmatprep.subr.bf16.mxu0 0
        %2046 = vmatpush2.bf16.msra.mxu0 0
        %2047 = vmatprep.subr.bf16.mxu0 0
        %2048 = vmatpush2.bf16.msra.mxu0 0
        %2049 = vmatprep.subr.bf16.mxu0 0
        %2050 = vmatpush2.bf16.msra.mxu0 0
        %2051 = vmatprep.mubr.bf16.mxu0 0
        %2052 = vmatmul.mubr.bf16.gmra.mxu0 %v1547
        %v2053 = vpop.f32.mrf.mxu0
        %v2054 = vadd.f32 %v1633, %v2053
        %v2055 = vpop.f32.mrf.mxu0
        %v2056 = vadd.f32 %v1637, %v2055
        %v2057 = vpop.f32.mrf.mxu0
        %v2058 = vpop.f32.mrf.mxu0
        %2059 = vdwg.mxu0
        %2060 = vmatprep.subr.bf16.mxu0 0
        %2061 = vmatpush1.bf16.msra.mxu0 %v1880
        %2062 = vmatprep.subr.bf16.mxu0 0
        %2063 = vmatpush1.bf16.msra.mxu0 %v1873
        %2064 = vmatprep.subr.bf16.mxu0 0
        %2065 = vmatpush1.bf16.msra.mxu0 %v1866
        %2066 = vmatprep.subr.bf16.mxu0 0
        %2067 = vmatpush1.bf16.msra.mxu0 %v1859
        %2068 = vmatprep.subr.bf16.mxu0 0
        %2069 = vmatpush1.bf16.msra.mxu0 %v1852
        %2070 = vmatprep.subr.bf16.mxu0 0
        %2071 = vmatpush1.bf16.msra.mxu0 %v1845
        %2072 = vmatprep.subr.bf16.mxu0 0
        %2073 = vmatpush1.bf16.msra.mxu0 %v1838
        %2074 = vmatprep.subr.bf16.mxu0 0
        %2075 = vmatpush1.bf16.msra.mxu0 %v1831
        %2076 = vmatprep.subr.bf16.mxu0 0
        %2077 = vmatpush2.bf16.msra.mxu0 0
        %2078 = vmatprep.subr.bf16.mxu0 0
        %2079 = vmatpush2.bf16.msra.mxu0 0
        %2080 = vmatprep.subr.bf16.mxu0 0
        %2081 = vmatpush2.bf16.msra.mxu0 0
        %2082 = vmatprep.subr.bf16.mxu0 0
        %2083 = vmatpush2.bf16.msra.mxu0 0
        %2084 = vmatprep.subr.bf16.mxu0 0
        %2085 = vmatpush2.bf16.msra.mxu0 0
        %2086 = vmatprep.subr.bf16.mxu0 0
        %2087 = vmatpush2.bf16.msra.mxu0 0
        %2088 = vmatprep.subr.bf16.mxu0 0
        %2089 = vmatpush2.bf16.msra.mxu0 0
        %2090 = vmatprep.subr.bf16.mxu0 0
        %2091 = vmatpush2.bf16.msra.mxu0 0
        %2092 = vmatprep.mubr.bf16.mxu0 0
        %2093 = vmatmul.mubr.bf16.gmra.mxu0 %v1547
        %v2094 = vpop.f32.mrf.mxu0
        %v2095 = vadd.f32 %v1641, %v2094
        %v2096 = vpop.f32.mrf.mxu0
        %v2097 = vpop.f32.mrf.mxu0
        %v2098 = vpop.f32.mrf.mxu0
        %2099 = vdwg.mxu0
        %v2100 = vmul.f32 %v1972, 0.5
        %v2101 = vmul.f32 %v1974, 0.5
        %v2102 = vmul.f32 %v2013, 0.5
        %v2103 = vmul.f32 %v2015, 0.5
        %v2104 = vmul.f32 %v2054, 0.5
        %v2105 = vmul.f32 %v2056, 0.5
        %v2106 = vmul.f32 %v2095, 0.5
        %v2107 = vtanh.pop %v2100
        %v2108 = vtanh.pop %v2101
        %v2109 = vtanh.pop %v2102
        %v2110 = vtanh.pop %v2103
        %v2111 = vtanh.pop %v2104
        %v2112 = vtanh.pop %v2105
        %v2113 = vtanh.pop %v2106
        %v2114 = vmul.f32 %v2107, 0.5
        %v2115 = vmul.f32 %v2108, 0.5
        %v2116 = vmul.f32 %v2109, 0.5
        %v2117 = vmul.f32 %v2110, 0.5
        %v2118 = vmul.f32 %v2111, 0.5
        %v2119 = vmul.f32 %v2112, 0.5
        %v2120 = vmul.f32 %v2113, 0.5
        %v2121 = vadd.f32 %v2114, 0.5
        %v2122 = vadd.f32 %v2115, 0.5
        %v2123 = vadd.f32 %v2116, 0.5
        %v2124 = vadd.f32 %v2117, 0.5
        %v2125 = vadd.f32 %v2118, 0.5
        %v2126 = vadd.f32 %v2119, 0.5
        %v2127 = vadd.f32 %v2120, 0.5
        %2128 = vst [vmem:[%s494] sm:$0xff] %v1345
        %v2129 = vpack.c.bf16 %v2121, %v2121
        %v2130 = vpack.c.bf16 %v2122, %v2122
        %v2131 = vpack.c.bf16 %v2123, %v2123
        %v2132 = vpack.c.bf16 %v2124, %v2124
        %v2133 = vpack.c.bf16 %v2125, %v2125
        %v2134 = vpack.c.bf16 %v2126, %v2126
        %v2135 = vpack.c.bf16 %v2127, %v2127
        %v2143 = vunpack.c.l.b16 %v2129
        %v2144 = vunpack.c.l.b16 %v2130
        %v2145 = vunpack.c.l.b16 %v2131
        %v2146 = vunpack.c.l.b16 %v2132
        %v2147 = vunpack.c.l.b16 %v2133
        %v2148 = vunpack.c.l.b16 %v2134
        %v2149 = vunpack.c.l.b16 %v2135
        %v2150 = vpack.c.b16 %v2144, %v2143
        %v2151 = vpack.c.b16 %v2146, %v2145
        %v2152 = vpack.c.b16 %v2148, %v2147
        %v2153 = vpack.c.b16 %v2149, %v2149
        %2158 = vst [vmem:[%s501] sm:$0xff] %v2150
        %2159 = vst [vmem:[%s501 + $0x8] sm:$0xff] %v2151
        %2160 = vst [vmem:[%s501 + $0x10] sm:$0xff] %v2152
        %2161 = vst [vmem:[%s501 + $0x18] sm:$0xf] %v2153
        %s2162 = sand.u32 %s320, 1
        %s2163 = scalar_lea.sflag [#allocation4], %s2162
        %s2164 = sand.u32 %s320, 1
        %s2165 = smul.addr %s2164, 8
        %s2166 = scalar_lea.vmem [#allocation7], %s2165
        %s2167 = sand.u32 %s346, 1
        %s2168 = scalar_lea.sflag [#allocation9], %s2167
        %s2169 = sand.u32 %s346, 1
        %s2170 = smul.addr %s2169, 28
        %s2171 = scalar_lea.vmem [#allocation8], %s2170
        // Predicated region
        $region81: #{tpu_custom_call.1} parent=71 // pred_check
          %p2172 = pneg %p330
        $region82: #{tpu_custom_call.1} parent=71 // pred_check_branch
          %2174 = sbr.rel (%p2172) target = $region84
        $region83: #{tpu_custom_call.1} parent=71 // pred_region
          %s2176 = ssub.s32 128, 128
          %2177 = vsyncadd %s2163, %s2176
          %s2178 = smul.addr %s34, 128
          %s2179 = scalar_lea.hbm %s13, %s2178
          %s2181 = sshll.u32 %s2166, 4
          %s2182 = int_to_ptr.vmem [resolvable:$true] %s2181
          %2184 = dma.vmem_to_hbm [thread:$0]  %s2182, 128, %s2179, %s2163
        $region84: #{tpu_custom_call.1} parent=71 // pred_fallthru
          _
        // Predicated region
        $region85: #{tpu_custom_call.1} parent=71 // pred_check
          %p2185 = pneg %p356
        $region86: #{tpu_custom_call.1} parent=71 // pred_check_branch
          %2187 = sbr.rel (%p2185) target = $region88
        $region87: #{tpu_custom_call.1} parent=71 // pred_region
          %s2189 = ssub.s32 448, 448
          %2190 = vsyncadd %s2168, %s2189
          %s2191 = smul.addr %s34, 7
          %s2192 = smul.addr %s2191, 64
          %s2193 = scalar_lea.hbm %s14, %s2192
          %s2195 = sshll.u32 %s2171, 4
          %s2196 = int_to_ptr.vmem [resolvable:$true] %s2195
          %2198 = dma.vmem_to_hbm [thread:$0]  %s2196, 448, %s2193, %s2168
        $region88: #{tpu_custom_call.1} parent=71 // pred_fallthru
          _
      $region72: #{tpu_custom_call.1} parent=5 // pred_fallthru
        _
      %p2199 = scmp.le.s32.totalorder 2, %s29
      // Predicated region
      $region89: #{tpu_custom_call.1} parent=5 // pred_check
        %p2200 = pneg %p2199
      $region90: #{tpu_custom_call.1} parent=5 // pred_check_branch
        %2202 = sbr.rel (%p2200) target = $region92
      $region91: #{tpu_custom_call.1} parent=5 // pred_region
        %s2203 = ssub.s32 %s29, 2
        // Predicated region
        $region93: #{tpu_custom_call.1} parent=91 // pred_check
          %p2204 = pneg %p336
        $region94: #{tpu_custom_call.1} parent=91 // pred_check_branch
          %2206 = sbr.rel (%p2204) target = $region96
        $region95: #{tpu_custom_call.1} parent=91 // pred_region
          %s2207 = sand.u32 %s321, 1
          %s2208 = scalar_lea.sflag [#allocation4], %s2207
          %s2209 = sand.u32 %s321, 1
          %s2210 = smul.addr %s2209, 8
          %s2211 = scalar_lea.vmem [#allocation7], %s2210
          %2212 = dma.done %s2208, 128
        $region96: #{tpu_custom_call.1} parent=91 // pred_fallthru
          _
        // Predicated region
        $region97: #{tpu_custom_call.1} parent=91 // pred_check
          %p2213 = pneg %p362
        $region98: #{tpu_custom_call.1} parent=91 // pred_check_branch
          %2215 = sbr.rel (%p2213) target = $region100
        $region99: #{tpu_custom_call.1} parent=91 // pred_region
          %s2216 = sand.u32 %s347, 1
          %s2217 = scalar_lea.sflag [#allocation9], %s2216
          %s2218 = sand.u32 %s347, 1
          %s2219 = smul.addr %s2218, 28
          %s2220 = scalar_lea.vmem [#allocation8], %s2219
          %2221 = dma.done %s2217, 448
        $region100: #{tpu_custom_call.1} parent=91 // pred_fallthru
          _
      $region92: #{tpu_custom_call.1} parent=5 // pred_fallthru
        _
    $region6: #{tpu_custom_call.1} parent=1 // loop_footer
      %s33 = sadd.s32 1, %s29
    $region7: #{tpu_custom_call.1} parent=1 // loop_footer_branch
      %28 = sbr.rel target = $region3
    $region8: #{tpu_custom_call.1} parent=1 // loop_exit
      _
    %2222 = vsyncpa [#allocation3], 1
    %s2223 = scalar_lea.sflag [#allocation3], 1
    %2224 = vsyncpa %s2223, 1
    %2225 = vsyncpa [#allocation6], 1
    %2226 = vsyncpa [#allocation4], 1
    %s2227 = scalar_lea.sflag [#allocation4], 1
    %2228 = vsyncpa %s2227, 1
    %2229 = vsyncpa [#allocation9], 1
    %s2230 = scalar_lea.sflag [#allocation9], 1
    %2231 = vsyncpa %s2230, 1

</llo_original>
